<compile_context>
chip_gen: v6e
topology: v6e:2x2x1
jax: 0.10.0
libtpu: 0.0.40
codegen_flags: <defaults>
</compile_context>

<pallas_src>
import functools
import math

import jax
import jax.numpy as jnp
from jax import lax
from jax.experimental import pallas as pl
from jax.experimental.pallas import tpu as pltpu


def _cross_attn_kernel(q_in_ref, k_in_ref, v_in_ref, tgt_ref,
                       wq_ref, wk_ref, wv_ref, wo_ref,
                       bq_ref, bk_ref, bv_ref, bo_ref,
                       gamma_ref, beta_ref,
                       out_ref, attn_ref,
                       *, nhead, eps):
    # Block shapes:
    #   q_in_ref, tgt_ref : (1, tl, E)     k_in_ref, v_in_ref : (1, S, E)
    #   w*_ref            : (E, E)  (already (in, out) layout)
    #   b*_ref, gamma/beta: (1, E)
    #   out_ref           : (1, tl, E)     attn_ref           : (1, tl, S)
    f32 = jnp.float32
    q_in = q_in_ref[0].astype(f32)
    k_in = k_in_ref[0].astype(f32)
    v_in = v_in_ref[0].astype(f32)

    # In-projections on the MXU with f32 accumulation.
    q = jnp.dot(q_in, wq_ref[...].astype(f32), preferred_element_type=f32)
    q = q + bq_ref[...].astype(f32)
    k = jnp.dot(k_in, wk_ref[...].astype(f32), preferred_element_type=f32)
    k = k + bk_ref[...].astype(f32)
    v = jnp.dot(v_in, wv_ref[...].astype(f32), preferred_element_type=f32)
    v = v + bv_ref[...].astype(f32)

    tl_rows, E = q.shape
    S = k.shape[0]
    dh = E // nhead
    scale = 1.0 / math.sqrt(dh)

    attn_sum = jnp.zeros((tl_rows, S), f32)
    ctx_parts = []
    for h in range(nhead):                       # nhead is small & static
        lo = h * dh
        qs = q[:, lo:lo + dh] * scale            # (tl, dh)
        ks = k[:, lo:lo + dh]                    # (S, dh)
        vs = v[:, lo:lo + dh]                    # (S, dh)
        # scores = qs @ ks^T without materializing the transpose (NT matmul).
        s = lax.dot_general(qs, ks, (((1,), (1,)), ((), ())),
                            preferred_element_type=f32)       # (tl, S)
        m = jnp.max(s, axis=-1, keepdims=True)
        p = jnp.exp(s - m)
        p = p / jnp.sum(p, axis=-1, keepdims=True)
        attn_sum = attn_sum + p
        ctx_parts.append(jnp.dot(p, vs, preferred_element_type=f32))
    ctx = jnp.concatenate(ctx_parts, axis=-1)    # (tl, E)

    # Output projection + residual + LayerNorm (post-norm; dropout p=0 -> id).
    attn_out = jnp.dot(ctx, wo_ref[...].astype(f32), preferred_element_type=f32)
    attn_out = attn_out + bo_ref[...].astype(f32)
    y = tgt_ref[0].astype(f32) + attn_out
    mean = jnp.mean(y, axis=-1, keepdims=True)
    yc = y - mean
    var = jnp.mean(yc * yc, axis=-1, keepdims=True)
    y = yc * lax.rsqrt(var + eps)
    y = y * gamma_ref[...].astype(f32) + beta_ref[...].astype(f32)

    out_ref[0] = y.astype(out_ref.dtype)
    attn_ref[0] = (attn_sum * (1.0 / nhead)).astype(attn_ref.dtype)


def _round_up(x, m):
    return ((x + m - 1) // m) * m


def cross_attention_layer(tgt, memory, params, *, nhead,
                          pos=None, query_pos=None, eps=1e-5,
                          q_tile=128, interpret=False):
    """Fused CrossAttentionLayer.forward_post.

    tgt: (L, B, E), memory: (S, B, E)  (torch (seq, batch, embed) layout).
    Returns (out (L, B, E), avg_attn (B, L, S)).
    """
    L, B, E = tgt.shape
    S = memory.shape[0]
    assert E % nhead == 0, "d_model must be divisible by nhead"

    # Positional embeddings fused into the inputs (cheap elementwise adds), then
    # (seq, batch, E) -> (batch, seq, E) so the feature dim is last (lane axis).
    q_in = tgt if query_pos is None else tgt + query_pos
    k_in = memory if pos is None else memory + pos
    q_in = jnp.transpose(q_in, (1, 0, 2))
    k_in = jnp.transpose(k_in, (1, 0, 2))
    v_in = jnp.transpose(memory, (1, 0, 2))
    tgt_b = jnp.transpose(tgt, (1, 0, 2))

    # Big query-row tiles (8-aligned, up to q_tile); pad L instead of asserting.
    tl = min(q_tile, _round_up(L, 8))
    Lp = _round_up(L, tl)
    if Lp != L:
        pad = ((0, 0), (0, Lp - L), (0, 0))
        q_in = jnp.pad(q_in, pad)
        tgt_b = jnp.pad(tgt_b, pad)

    grid = (B, Lp // tl)

    def qtile_map(b, i):
        return (b, i, 0)

    def kv_map(b, i):
        return (b, 0, 0)

    def const2_map(b, i):
        return (0, 0)

    kernel = functools.partial(_cross_attn_kernel, nhead=nhead, eps=eps)

    out, avg_attn = pl.pallas_call(
        kernel,
        out_shape=(
            jax.ShapeDtypeStruct((B, Lp, E), tgt.dtype),
            jax.ShapeDtypeStruct((B, Lp, S), jnp.float32),
        ),
        grid=grid,
        in_specs=[
            pl.BlockSpec((1, tl, E), qtile_map),   # q (tgt + query_pos)
            pl.BlockSpec((1, S, E), kv_map),       # k (memory + pos)
            pl.BlockSpec((1, S, E), kv_map),       # v (memory)
            pl.BlockSpec((1, tl, E), qtile_map),   # tgt (residual)
            pl.BlockSpec((E, E), const2_map),      # wq  (in, out)
            pl.BlockSpec((E, E), const2_map),      # wk
            pl.BlockSpec((E, E), const2_map),      # wv
            pl.BlockSpec((E, E), const2_map),      # wo
            pl.BlockSpec((1, E), const2_map),      # bq
            pl.BlockSpec((1, E), const2_map),      # bk
            pl.BlockSpec((1, E), const2_map),      # bv
            pl.BlockSpec((1, E), const2_map),      # bo
            pl.BlockSpec((1, E), const2_map),      # layernorm gamma
            pl.BlockSpec((1, E), const2_map),      # layernorm beta
        ],
        out_specs=(
            pl.BlockSpec((1, tl, E), qtile_map),
            pl.BlockSpec((1, tl, S), qtile_map),
        ),
        compiler_params=pltpu.CompilerParams(
            dimension_semantics=("parallel", "parallel")),
        interpret=interpret,
    )(q_in, k_in, v_in, tgt_b,
      params["wq"], params["wk"], params["wv"], params["wo"],
      params["bq"], params["bk"], params["bv"], params["bo"],
      params["gamma"], params["beta"])

    out = out[:, :L]
    avg_attn = avg_attn[:, :L]
    # Back to torch layout: out (L, B, E); avg_attn is (B, L, S) like torch.
    return jnp.transpose(out, (1, 0, 2)), avg_attn


def init_cross_attention_params(key, d_model, dtype=jnp.float32):
    """Parameters for CrossAttentionLayer.

    Projection weights are stored pre-transposed, i.e. (in, out) = torch W^T,
    so the kernel never transposes at call time.  Weights use xavier_uniform
    (matching _reset_parameters); biases are random just to exercise the path.
    """
    E = d_model
    ks = jax.random.split(key, 8)
    bound = math.sqrt(6.0 / (E + E))

    def w(k):
        return jax.random.uniform(k, (E, E), dtype, -bound, bound)

    def b(k):
        return jax.random.uniform(k, (1, E), dtype, -0.1, 0.1)

    return dict(
        wq=w(ks[0]), wk=w(ks[1]), wv=w(ks[2]), wo=w(ks[3]),
        bq=b(ks[4]), bk=b(ks[5]), bv=b(ks[6]), bo=b(ks[7]),
        gamma=jnp.ones((1, E), dtype), beta=jnp.zeros((1, E), dtype),
    )


def cross_attention_reference(tgt, memory, params, *, nhead,
                              pos=None, query_pos=None, eps=1e-5):
    """Pure-JAX reference matching torch forward_post semantics."""
    L, B, E = tgt.shape
    S = memory.shape[0]
    dh = E // nhead
    q_in = tgt if query_pos is None else tgt + query_pos
    k_in = memory if pos is None else memory + pos
    q_in = jnp.transpose(q_in, (1, 0, 2))
    k_in = jnp.transpose(k_in, (1, 0, 2))
    v_in = jnp.transpose(memory, (1, 0, 2))
    tgt_b = jnp.transpose(tgt, (1, 0, 2))

    q = q_in @ params["wq"] + params["bq"]
    k = k_in @ params["wk"] + params["bk"]
    v = v_in @ params["wv"] + params["bv"]
    q = q.reshape(B, L, nhead, dh).transpose(0, 2, 1, 3) / math.sqrt(dh)
    k = k.reshape(B, S, nhead, dh).transpose(0, 2, 1, 3)
    v = v.reshape(B, S, nhead, dh).transpose(0, 2, 1, 3)
    scores = jnp.einsum("bhld,bhsd->bhls", q, k)
    attn = jax.nn.softmax(scores, axis=-1)
    ctx = jnp.einsum("bhls,bhsd->bhld", attn, v)
    ctx = ctx.transpose(0, 2, 1, 3).reshape(B, L, E)
    attn_out = ctx @ params["wo"] + params["bo"]
    y = tgt_b + attn_out
    mean = y.mean(-1, keepdims=True)
    var = ((y - mean) ** 2).mean(-1, keepdims=True)
    y = (y - mean) / jnp.sqrt(var + eps)
    y = y * params["gamma"] + params["beta"]
    return jnp.transpose(y, (1, 0, 2)), attn.mean(axis=1)


if __name__ == "__main__":
    key = jax.random.PRNGKey(0)
    d_model, nhead = 128, 4          # lane-aligned feature dim, 4 heads
    L, S, B = 16, 128, 2             # num queries, memory tokens, batch

    kt, km, kqp, kpo, kpar = jax.random.split(key, 5)
    tgt = jax.random.normal(kt, (L, B, d_model), jnp.float32)
    memory = jax.random.normal(km, (S, B, d_model), jnp.float32)
    query_pos = jax.random.normal(kqp, (L, B, d_model), jnp.float32)
    pos = jax.random.normal(kpo, (S, B, d_model), jnp.float32)
    params = init_cross_attention_params(kpar, d_model)

    out, avg_attn = cross_attention_layer(tgt, memory, params, nhead=nhead,
                                          pos=pos, query_pos=query_pos)
    out = jax.block_until_ready(out)
    avg_attn = jax.block_until_ready(avg_attn)

    ref_out, ref_attn = cross_attention_reference(tgt, memory, params,
                                                  nhead=nhead, pos=pos,
                                                  query_pos=query_pos)

    assert out.shape == (L, B, d_model)
    assert avg_attn.shape == (B, L, S)
    assert jnp.allclose(out, ref_out, atol=2e-2, rtol=2e-2), \
        float(jnp.max(jnp.abs(out - ref_out)))
    assert jnp.allclose(avg_attn, ref_attn, atol=1e-2, rtol=1e-2), \
        float(jnp.max(jnp.abs(avg_attn - ref_attn)))

    print("KERNEL_OK")
</pallas_src>

<mosaic_0001>
module attributes {stable_mosaic.version = 11 : i64} {
  func.func @_cross_attn_kernel(%arg0: i32, %arg1: i32, %arg2: memref<1x16x128xf32, #tpu.memory_space<vmem>>, %arg3: memref<1x128x128xf32, #tpu.memory_space<vmem>>, %arg4: memref<1x128x128xf32, #tpu.memory_space<vmem>>, %arg5: memref<1x16x128xf32, #tpu.memory_space<vmem>>, %arg6: memref<128x128xf32, #tpu.memory_space<vmem>>, %arg7: memref<128x128xf32, #tpu.memory_space<vmem>>, %arg8: memref<128x128xf32, #tpu.memory_space<vmem>>, %arg9: memref<128x128xf32, #tpu.memory_space<vmem>>, %arg10: memref<1x128xf32, #tpu.memory_space<vmem>>, %arg11: memref<1x128xf32, #tpu.memory_space<vmem>>, %arg12: memref<1x128xf32, #tpu.memory_space<vmem>>, %arg13: memref<1x128xf32, #tpu.memory_space<vmem>>, %arg14: memref<1x128xf32, #tpu.memory_space<vmem>>, %arg15: memref<1x128xf32, #tpu.memory_space<vmem>>, %arg16: memref<1x16x128xf32, #tpu.memory_space<vmem>>, %arg17: memref<1x16x128xf32, #tpu.memory_space<vmem>>) attributes {dimension_semantics = [#tpu.dimension_semantics<parallel>, #tpu.dimension_semantics<parallel>], iteration_bounds = array<i64: 2, 1>, scalar_prefetch = 0 : i64, scratch_operands = 0 : i64, tpu.core_type = #tpu.core_type<tc>, window_params = [{transform_indices = @transform_0, window_bounds = array<i64: 1, 16, 128>}, {transform_indices = @transform_1, window_bounds = array<i64: 1, 128, 128>}, {transform_indices = @transform_2, window_bounds = array<i64: 1, 128, 128>}, {transform_indices = @transform_3, window_bounds = array<i64: 1, 16, 128>}, {pipeline_mode = #tpu.pipeline_mode<synchronous>, transform_indices = @transform_4, window_bounds = array<i64: 128, 128>}, {pipeline_mode = #tpu.pipeline_mode<synchronous>, transform_indices = @transform_5, window_bounds = array<i64: 128, 128>}, {pipeline_mode = #tpu.pipeline_mode<synchronous>, transform_indices = @transform_6, window_bounds = array<i64: 128, 128>}, {pipeline_mode = #tpu.pipeline_mode<synchronous>, transform_indices = @transform_7, window_bounds = array<i64: 128, 128>}, {pipeline_mode = #tpu.pipeline_mode<synchronous>, transform_indices = @transform_8, window_bounds = array<i64: 1, 128>}, {pipeline_mode = #tpu.pipeline_mode<synchronous>, transform_indices = @transform_9, window_bounds = array<i64: 1, 128>}, {pipeline_mode = #tpu.pipeline_mode<synchronous>, transform_indices = @transform_10, window_bounds = array<i64: 1, 128>}, {pipeline_mode = #tpu.pipeline_mode<synchronous>, transform_indices = @transform_11, window_bounds = array<i64: 1, 128>}, {pipeline_mode = #tpu.pipeline_mode<synchronous>, transform_indices = @transform_12, window_bounds = array<i64: 1, 128>}, {pipeline_mode = #tpu.pipeline_mode<synchronous>, transform_indices = @transform_13, window_bounds = array<i64: 1, 128>}, {transform_indices = @transform_14, window_bounds = array<i64: 1, 16, 128>}, {transform_indices = @transform_15, window_bounds = array<i64: 1, 16, 128>}]} {
    %c0 = arith.constant 0 : index
    %c0_0 = arith.constant 0 : index
    %c0_1 = arith.constant 0 : index
    %0 = vector.load %arg2[%c0, %c0_0, %c0_1] : memref<1x16x128xf32, #tpu.memory_space<vmem>>, vector<1x16x128xf32>
    %1 = vector.shape_cast %0 : vector<1x16x128xf32> to vector<16x128xf32>
    %c0_2 = arith.constant 0 : index
    %c0_3 = arith.constant 0 : index
    %c0_4 = arith.constant 0 : index
    %2 = vector.load %arg3[%c0_2, %c0_3, %c0_4] : memref<1x128x128xf32, #tpu.memory_space<vmem>>, vector<1x128x128xf32>
    %3 = vector.shape_cast %2 : vector<1x128x128xf32> to vector<128x128xf32>
    %c0_5 = arith.constant 0 : index
    %c0_6 = arith.constant 0 : index
    %c0_7 = arith.constant 0 : index
    %4 = vector.load %arg4[%c0_5, %c0_6, %c0_7] : memref<1x128x128xf32, #tpu.memory_space<vmem>>, vector<1x128x128xf32>
    %5 = vector.shape_cast %4 : vector<1x128x128xf32> to vector<128x128xf32>
    %c0_8 = arith.constant 0 : index
    %c0_9 = arith.constant 0 : index
    %6 = vector.load %arg6[%c0_8, %c0_9] : memref<128x128xf32, #tpu.memory_space<vmem>>, vector<128x128xf32>
    %cst = arith.constant dense<0.000000e+00> : vector<16x128xf32>
    %7 = tpu.matmul %1, %6, %cst {dimension_numbers = #tpu.dot_dimension_numbers<[1], [0], [0], [1], [0, 0, 1, 1], [], []>} : vector<16x128xf32>, vector<128x128xf32>, vector<16x128xf32> -> vector<16x128xf32>
    %c0_10 = arith.constant 0 : index
    %c0_11 = arith.constant 0 : index
    %8 = vector.load %arg10[%c0_10, %c0_11] : memref<1x128xf32, #tpu.memory_space<vmem>>, vector<1x128xf32>
    %9 = vector.broadcast %8 : vector<1x128xf32> to vector<16x128xf32>
    %10 = arith.addf %7, %9 : vector<16x128xf32>
    %c0_12 = arith.constant 0 : index
    %c0_13 = arith.constant 0 : index
    %11 = vector.load %arg7[%c0_12, %c0_13] : memref<128x128xf32, #tpu.memory_space<vmem>>, vector<128x128xf32>
    %cst_14 = arith.constant dense<0.000000e+00> : vector<128x128xf32>
    %12 = tpu.matmul %3, %11, %cst_14 {dimension_numbers = #tpu.dot_dimension_numbers<[1], [0], [0], [1], [0, 0, 1, 1], [], []>} : vector<128x128xf32>, vector<128x128xf32>, vector<128x128xf32> -> vector<128x128xf32>
    %c0_15 = arith.constant 0 : index
    %c0_16 = arith.constant 0 : index
    %13 = vector.load %arg11[%c0_15, %c0_16] : memref<1x128xf32, #tpu.memory_space<vmem>>, vector<1x128xf32>
    %14 = vector.broadcast %13 : vector<1x128xf32> to vector<128x128xf32>
    %15 = arith.addf %12, %14 : vector<128x128xf32>
    %c0_17 = arith.constant 0 : index
    %c0_18 = arith.constant 0 : index
    %16 = vector.load %arg8[%c0_17, %c0_18] : memref<128x128xf32, #tpu.memory_space<vmem>>, vector<128x128xf32>
    %cst_19 = arith.constant dense<0.000000e+00> : vector<128x128xf32>
    %17 = tpu.matmul %5, %16, %cst_19 {dimension_numbers = #tpu.dot_dimension_numbers<[1], [0], [0], [1], [0, 0, 1, 1], [], []>} : vector<128x128xf32>, vector<128x128xf32>, vector<128x128xf32> -> vector<128x128xf32>
    %c0_20 = arith.constant 0 : index
    %c0_21 = arith.constant 0 : index
    %18 = vector.load %arg12[%c0_20, %c0_21] : memref<1x128xf32, #tpu.memory_space<vmem>>, vector<1x128xf32>
    %19 = vector.broadcast %18 : vector<1x128xf32> to vector<128x128xf32>
    %20 = arith.addf %17, %19 : vector<128x128xf32>
    %cst_22 = arith.constant 0.000000e+00 : f32
    %21 = vector.broadcast %cst_22 : f32 to vector<16x128xf32>
    %22 = vector.extract_strided_slice %10 {offsets = [0, 0], sizes = [16, 32], strides = [1, 1]} : vector<16x128xf32> to vector<16x32xf32>
    %cst_23 = arith.constant 0.176776692 : f32
    %23 = vector.broadcast %cst_23 : f32 to vector<16x32xf32>
    %24 = arith.mulf %22, %23 : vector<16x32xf32>
    %25 = vector.extract_strided_slice %15 {offsets = [0, 0], sizes = [128, 32], strides = [1, 1]} : vector<128x128xf32> to vector<128x32xf32>
    %26 = vector.extract_strided_slice %20 {offsets = [0, 0], sizes = [128, 32], strides = [1, 1]} : vector<128x128xf32> to vector<128x32xf32>
    %cst_24 = arith.constant dense<0.000000e+00> : vector<16x128xf32>
    %27 = tpu.matmul %24, %25, %cst_24 {dimension_numbers = #tpu.dot_dimension_numbers<[1], [1], [0], [0], [0, 0, 1, 0], [], []>} : vector<16x32xf32>, vector<128x32xf32>, vector<16x128xf32> -> vector<16x128xf32>
    %cst_25 = arith.constant dense<0xFF800000> : vector<16xf32>
    %28 = vector.multi_reduction <maximumf>, %27, %cst_25 [1] : vector<16x128xf32> to vector<16xf32>
    %29 = vector.shape_cast %28 : vector<16xf32> to vector<16x1xf32>
    %30 = vector.broadcast %29 : vector<16x1xf32> to vector<16x128xf32>
    %31 = arith.subf %27, %30 : vector<16x128xf32>
    %32 = math.exp %31 : vector<16x128xf32>
    %cst_26 = arith.constant dense<0.000000e+00> : vector<16xf32>
    %33 = vector.multi_reduction <add>, %32, %cst_26 [1] : vector<16x128xf32> to vector<16xf32>
    %34 = vector.shape_cast %33 : vector<16xf32> to vector<16x1xf32>
    %35 = vector.broadcast %34 : vector<16x1xf32> to vector<16x128xf32>
    %36 = arith.divf %32, %35 : vector<16x128xf32>
    %37 = arith.addf %21, %36 : vector<16x128xf32>
    %cst_27 = arith.constant dense<0.000000e+00> : vector<16x32xf32>
    %38 = tpu.matmul %36, %26, %cst_27 {dimension_numbers = #tpu.dot_dimension_numbers<[1], [0], [0], [1], [0, 0, 1, 1], [], []>} : vector<16x128xf32>, vector<128x32xf32>, vector<16x32xf32> -> vector<16x32xf32>
    %39 = vector.extract_strided_slice %10 {offsets = [0, 32], sizes = [16, 32], strides = [1, 1]} : vector<16x128xf32> to vector<16x32xf32>
    %cst_28 = arith.constant 0.176776692 : f32
    %40 = vector.broadcast %cst_28 : f32 to vector<16x32xf32>
    %41 = arith.mulf %39, %40 : vector<16x32xf32>
    %42 = vector.extract_strided_slice %15 {offsets = [0, 32], sizes = [128, 32], strides = [1, 1]} : vector<128x128xf32> to vector<128x32xf32>
    %43 = vector.extract_strided_slice %20 {offsets = [0, 32], sizes = [128, 32], strides = [1, 1]} : vector<128x128xf32> to vector<128x32xf32>
    %cst_29 = arith.constant dense<0.000000e+00> : vector<16x128xf32>
    %44 = tpu.matmul %41, %42, %cst_29 {dimension_numbers = #tpu.dot_dimension_numbers<[1], [1], [0], [0], [0, 0, 1, 0], [], []>} : vector<16x32xf32>, vector<128x32xf32>, vector<16x128xf32> -> vector<16x128xf32>
    %cst_30 = arith.constant dense<0xFF800000> : vector<16xf32>
    %45 = vector.multi_reduction <maximumf>, %44, %cst_30 [1] : vector<16x128xf32> to vector<16xf32>
    %46 = vector.shape_cast %45 : vector<16xf32> to vector<16x1xf32>
    %47 = vector.broadcast %46 : vector<16x1xf32> to vector<16x128xf32>
    %48 = arith.subf %44, %47 : vector<16x128xf32>
    %49 = math.exp %48 : vector<16x128xf32>
    %cst_31 = arith.constant dense<0.000000e+00> : vector<16xf32>
    %50 = vector.multi_reduction <add>, %49, %cst_31 [1] : vector<16x128xf32> to vector<16xf32>
    %51 = vector.shape_cast %50 : vector<16xf32> to vector<16x1xf32>
    %52 = vector.broadcast %51 : vector<16x1xf32> to vector<16x128xf32>
    %53 = arith.divf %49, %52 : vector<16x128xf32>
    %54 = arith.addf %37, %53 : vector<16x128xf32>
    %cst_32 = arith.constant dense<0.000000e+00> : vector<16x32xf32>
    %55 = tpu.matmul %53, %43, %cst_32 {dimension_numbers = #tpu.dot_dimension_numbers<[1], [0], [0], [1], [0, 0, 1, 1], [], []>} : vector<16x128xf32>, vector<128x32xf32>, vector<16x32xf32> -> vector<16x32xf32>
    %56 = vector.extract_strided_slice %10 {offsets = [0, 64], sizes = [16, 32], strides = [1, 1]} : vector<16x128xf32> to vector<16x32xf32>
    %cst_33 = arith.constant 0.176776692 : f32
    %57 = vector.broadcast %cst_33 : f32 to vector<16x32xf32>
    %58 = arith.mulf %56, %57 : vector<16x32xf32>
    %59 = vector.extract_strided_slice %15 {offsets = [0, 64], sizes = [128, 32], strides = [1, 1]} : vector<128x128xf32> to vector<128x32xf32>
    %60 = vector.extract_strided_slice %20 {offsets = [0, 64], sizes = [128, 32], strides = [1, 1]} : vector<128x128xf32> to vector<128x32xf32>
    %cst_34 = arith.constant dense<0.000000e+00> : vector<16x128xf32>
    %61 = tpu.matmul %58, %59, %cst_34 {dimension_numbers = #tpu.dot_dimension_numbers<[1], [1], [0], [0], [0, 0, 1, 0], [], []>} : vector<16x32xf32>, vector<128x32xf32>, vector<16x128xf32> -> vector<16x128xf32>
    %cst_35 = arith.constant dense<0xFF800000> : vector<16xf32>
    %62 = vector.multi_reduction <maximumf>, %61, %cst_35 [1] : vector<16x128xf32> to vector<16xf32>
    %63 = vector.shape_cast %62 : vector<16xf32> to vector<16x1xf32>
    %64 = vector.broadcast %63 : vector<16x1xf32> to vector<16x128xf32>
    %65 = arith.subf %61, %64 : vector<16x128xf32>
    %66 = math.exp %65 : vector<16x128xf32>
    %cst_36 = arith.constant dense<0.000000e+00> : vector<16xf32>
    %67 = vector.multi_reduction <add>, %66, %cst_36 [1] : vector<16x128xf32> to vector<16xf32>
    %68 = vector.shape_cast %67 : vector<16xf32> to vector<16x1xf32>
    %69 = vector.broadcast %68 : vector<16x1xf32> to vector<16x128xf32>
    %70 = arith.divf %66, %69 : vector<16x128xf32>
    %71 = arith.addf %54, %70 : vector<16x128xf32>
    %cst_37 = arith.constant dense<0.000000e+00> : vector<16x32xf32>
    %72 = tpu.matmul %70, %60, %cst_37 {dimension_numbers = #tpu.dot_dimension_numbers<[1], [0], [0], [1], [0, 0, 1, 1], [], []>} : vector<16x128xf32>, vector<128x32xf32>, vector<16x32xf32> -> vector<16x32xf32>
    %73 = vector.extract_strided_slice %10 {offsets = [0, 96], sizes = [16, 32], strides = [1, 1]} : vector<16x128xf32> to vector<16x32xf32>
    %cst_38 = arith.constant 0.176776692 : f32
    %74 = vector.broadcast %cst_38 : f32 to vector<16x32xf32>
    %75 = arith.mulf %73, %74 : vector<16x32xf32>
    %76 = vector.extract_strided_slice %15 {offsets = [0, 96], sizes = [128, 32], strides = [1, 1]} : vector<128x128xf32> to vector<128x32xf32>
    %77 = vector.extract_strided_slice %20 {offsets = [0, 96], sizes = [128, 32], strides = [1, 1]} : vector<128x128xf32> to vector<128x32xf32>
    %cst_39 = arith.constant dense<0.000000e+00> : vector<16x128xf32>
    %78 = tpu.matmul %75, %76, %cst_39 {dimension_numbers = #tpu.dot_dimension_numbers<[1], [1], [0], [0], [0, 0, 1, 0], [], []>} : vector<16x32xf32>, vector<128x32xf32>, vector<16x128xf32> -> vector<16x128xf32>
    %cst_40 = arith.constant dense<0xFF800000> : vector<16xf32>
    %79 = vector.multi_reduction <maximumf>, %78, %cst_40 [1] : vector<16x128xf32> to vector<16xf32>
    %80 = vector.shape_cast %79 : vector<16xf32> to vector<16x1xf32>
    %81 = vector.broadcast %80 : vector<16x1xf32> to vector<16x128xf32>
    %82 = arith.subf %78, %81 : vector<16x128xf32>
    %83 = math.exp %82 : vector<16x128xf32>
    %cst_41 = arith.constant dense<0.000000e+00> : vector<16xf32>
    %84 = vector.multi_reduction <add>, %83, %cst_41 [1] : vector<16x128xf32> to vector<16xf32>
    %85 = vector.shape_cast %84 : vector<16xf32> to vector<16x1xf32>
    %86 = vector.broadcast %85 : vector<16x1xf32> to vector<16x128xf32>
    %87 = arith.divf %83, %86 : vector<16x128xf32>
    %88 = arith.addf %71, %87 : vector<16x128xf32>
    %cst_42 = arith.constant dense<0.000000e+00> : vector<16x32xf32>
    %89 = tpu.matmul %87, %77, %cst_42 {dimension_numbers = #tpu.dot_dimension_numbers<[1], [0], [0], [1], [0, 0, 1, 1], [], []>} : vector<16x128xf32>, vector<128x32xf32>, vector<16x32xf32> -> vector<16x32xf32>
    %90 = tpu.concatenate %38, %55, %72, %89 in 1 : vector<16x32xf32>, vector<16x32xf32>, vector<16x32xf32>, vector<16x32xf32> -> vector<16x128xf32>
    %c0_43 = arith.constant 0 : index
    %c0_44 = arith.constant 0 : index
    %91 = vector.load %arg9[%c0_43, %c0_44] : memref<128x128xf32, #tpu.memory_space<vmem>>, vector<128x128xf32>
    %cst_45 = arith.constant dense<0.000000e+00> : vector<16x128xf32>
    %92 = tpu.matmul %90, %91, %cst_45 {dimension_numbers = #tpu.dot_dimension_numbers<[1], [0], [0], [1], [0, 0, 1, 1], [], []>} : vector<16x128xf32>, vector<128x128xf32>, vector<16x128xf32> -> vector<16x128xf32>
    %c0_46 = arith.constant 0 : index
    %c0_47 = arith.constant 0 : index
    %93 = vector.load %arg13[%c0_46, %c0_47] : memref<1x128xf32, #tpu.memory_space<vmem>>, vector<1x128xf32>
    %94 = vector.broadcast %93 : vector<1x128xf32> to vector<16x128xf32>
    %95 = arith.addf %92, %94 : vector<16x128xf32>
    %c0_48 = arith.constant 0 : index
    %c0_49 = arith.constant 0 : index
    %c0_50 = arith.constant 0 : index
    %96 = vector.load %arg5[%c0_48, %c0_49, %c0_50] : memref<1x16x128xf32, #tpu.memory_space<vmem>>, vector<1x16x128xf32>
    %97 = vector.shape_cast %96 : vector<1x16x128xf32> to vector<16x128xf32>
    %98 = arith.addf %97, %95 : vector<16x128xf32>
    %cst_51 = arith.constant dense<0.000000e+00> : vector<16xf32>
    %99 = vector.multi_reduction <add>, %98, %cst_51 [1] : vector<16x128xf32> to vector<16xf32>
    %100 = vector.shape_cast %99 : vector<16xf32> to vector<16x1xf32>
    %cst_52 = arith.constant 1.280000e+02 : f32
    %101 = vector.broadcast %cst_52 : f32 to vector<16x1xf32>
    %102 = arith.divf %100, %101 : vector<16x1xf32>
    %103 = vector.broadcast %102 : vector<16x1xf32> to vector<16x128xf32>
    %104 = arith.subf %98, %103 : vector<16x128xf32>
    %105 = arith.mulf %104, %104 : vector<16x128xf32>
    %cst_53 = arith.constant dense<0.000000e+00> : vector<16xf32>
    %106 = vector.multi_reduction <add>, %105, %cst_53 [1] : vector<16x128xf32> to vector<16xf32>
    %107 = vector.shape_cast %106 : vector<16xf32> to vector<16x1xf32>
    %cst_54 = arith.constant 1.280000e+02 : f32
    %108 = vector.broadcast %cst_54 : f32 to vector<16x1xf32>
    %109 = arith.divf %107, %108 : vector<16x1xf32>
    %cst_55 = arith.constant 9.99999974E-6 : f32
    %110 = vector.broadcast %cst_55 : f32 to vector<16x1xf32>
    %111 = arith.addf %109, %110 : vector<16x1xf32>
    %112 = math.rsqrt %111 : vector<16x1xf32>
    %113 = vector.broadcast %112 : vector<16x1xf32> to vector<16x128xf32>
    %114 = arith.mulf %104, %113 : vector<16x128xf32>
    %c0_56 = arith.constant 0 : index
    %c0_57 = arith.constant 0 : index
    %115 = vector.load %arg14[%c0_56, %c0_57] : memref<1x128xf32, #tpu.memory_space<vmem>>, vector<1x128xf32>
    %116 = vector.broadcast %115 : vector<1x128xf32> to vector<16x128xf32>
    %117 = arith.mulf %114, %116 : vector<16x128xf32>
    %c0_58 = arith.constant 0 : index
    %c0_59 = arith.constant 0 : index
    %118 = vector.load %arg15[%c0_58, %c0_59] : memref<1x128xf32, #tpu.memory_space<vmem>>, vector<1x128xf32>
    %119 = vector.broadcast %118 : vector<1x128xf32> to vector<16x128xf32>
    %120 = arith.addf %117, %119 : vector<16x128xf32>
    %c0_60 = arith.constant 0 : index
    %c0_61 = arith.constant 0 : index
    %c0_62 = arith.constant 0 : index
    %121 = vector.load %arg16[%c0_60, %c0_61, %c0_62] : memref<1x16x128xf32, #tpu.memory_space<vmem>>, vector<1x16x128xf32>
    %122 = vector.shape_cast %121 : vector<1x16x128xf32> to vector<16x128xf32>
    %123 = vector.shape_cast %120 : vector<16x128xf32> to vector<1x16x128xf32>
    tpu.vector_store %arg16[%c0_60, %c0_61, %c0_62], %123 {strides = array<i32>} : memref<1x16x128xf32, #tpu.memory_space<vmem>>, vector<1x16x128xf32>,
    %cst_63 = arith.constant 2.500000e-01 : f32
    %124 = vector.broadcast %cst_63 : f32 to vector<16x128xf32>
    %125 = arith.mulf %88, %124 : vector<16x128xf32>
    %c0_64 = arith.constant 0 : index
    %c0_65 = arith.constant 0 : index
    %c0_66 = arith.constant 0 : index
    %126 = vector.load %arg17[%c0_64, %c0_65, %c0_66] : memref<1x16x128xf32, #tpu.memory_space<vmem>>, vector<1x16x128xf32>
    %127 = vector.shape_cast %126 : vector<1x16x128xf32> to vector<16x128xf32>
    %128 = vector.shape_cast %125 : vector<16x128xf32> to vector<1x16x128xf32>
    tpu.vector_store %arg17[%c0_64, %c0_65, %c0_66], %128 {strides = array<i32>} : memref<1x16x128xf32, #tpu.memory_space<vmem>>, vector<1x16x128xf32>,
    return
  }
  func.func @transform_0(%arg0: i32, %arg1: i32) -> (i32, i32, i32) {
    %c0_i32 = arith.constant 0 : i32
    %c0_i32_0 = arith.constant 0 : i32
    return %arg0, %arg1, %c0_i32 : i32, i32, i32
  }
  func.func @transform_1(%arg0: i32, %arg1: i32) -> (i32, i32, i32) {
    %c0_i32 = arith.constant 0 : i32
    %c0_i32_0 = arith.constant 0 : i32
    %c0_i32_1 = arith.constant 0 : i32
    return %arg0, %c0_i32, %c0_i32_0 : i32, i32, i32
  }
  func.func @transform_2(%arg0: i32, %arg1: i32) -> (i32, i32, i32) {
    %c0_i32 = arith.constant 0 : i32
    %c0_i32_0 = arith.constant 0 : i32
    %c0_i32_1 = arith.constant 0 : i32
    return %arg0, %c0_i32, %c0_i32_0 : i32, i32, i32
  }
  func.func @transform_3(%arg0: i32, %arg1: i32) -> (i32, i32, i32) {
    %c0_i32 = arith.constant 0 : i32
    %c0_i32_0 = arith.constant 0 : i32
    return %arg0, %arg1, %c0_i32 : i32, i32, i32
  }
  func.func @transform_4(%arg0: i32, %arg1: i32) -> (i32, i32) {
    %c0_i32 = arith.constant 0 : i32
    %c0_i32_0 = arith.constant 0 : i32
    %c0_i32_1 = arith.constant 0 : i32
    return %c0_i32, %c0_i32_0 : i32, i32
  }
  func.func @transform_5(%arg0: i32, %arg1: i32) -> (i32, i32) {
    %c0_i32 = arith.constant 0 : i32
    %c0_i32_0 = arith.constant 0 : i32
    %c0_i32_1 = arith.constant 0 : i32
    return %c0_i32, %c0_i32_0 : i32, i32
  }
  func.func @transform_6(%arg0: i32, %arg1: i32) -> (i32, i32) {
    %c0_i32 = arith.constant 0 : i32
    %c0_i32_0 = arith.constant 0 : i32
    %c0_i32_1 = arith.constant 0 : i32
    return %c0_i32, %c0_i32_0 : i32, i32
  }
  func.func @transform_7(%arg0: i32, %arg1: i32) -> (i32, i32) {
    %c0_i32 = arith.constant 0 : i32
    %c0_i32_0 = arith.constant 0 : i32
    %c0_i32_1 = arith.constant 0 : i32
    return %c0_i32, %c0_i32_0 : i32, i32
  }
  func.func @transform_8(%arg0: i32, %arg1: i32) -> (i32, i32) {
    %c0_i32 = arith.constant 0 : i32
    %c0_i32_0 = arith.constant 0 : i32
    %c0_i32_1 = arith.constant 0 : i32
    return %c0_i32, %c0_i32_0 : i32, i32
  }
  func.func @transform_9(%arg0: i32, %arg1: i32) -> (i32, i32) {
    %c0_i32 = arith.constant 0 : i32
    %c0_i32_0 = arith.constant 0 : i32
    %c0_i32_1 = arith.constant 0 : i32
    return %c0_i32, %c0_i32_0 : i32, i32
  }
  func.func @transform_10(%arg0: i32, %arg1: i32) -> (i32, i32) {
    %c0_i32 = arith.constant 0 : i32
    %c0_i32_0 = arith.constant 0 : i32
    %c0_i32_1 = arith.constant 0 : i32
    return %c0_i32, %c0_i32_0 : i32, i32
  }
  func.func @transform_11(%arg0: i32, %arg1: i32) -> (i32, i32) {
    %c0_i32 = arith.constant 0 : i32
    %c0_i32_0 = arith.constant 0 : i32
    %c0_i32_1 = arith.constant 0 : i32
    return %c0_i32, %c0_i32_0 : i32, i32
  }
  func.func @transform_12(%arg0: i32, %arg1: i32) -> (i32, i32) {
    %c0_i32 = arith.constant 0 : i32
    %c0_i32_0 = arith.constant 0 : i32
    %c0_i32_1 = arith.constant 0 : i32
    return %c0_i32, %c0_i32_0 : i32, i32
  }
  func.func @transform_13(%arg0: i32, %arg1: i32) -> (i32, i32) {
    %c0_i32 = arith.constant 0 : i32
    %c0_i32_0 = arith.constant 0 : i32
    %c0_i32_1 = arith.constant 0 : i32
    return %c0_i32, %c0_i32_0 : i32, i32
  }
  func.func @transform_14(%arg0: i32, %arg1: i32) -> (i32, i32, i32) {
    %c0_i32 = arith.constant 0 : i32
    %c0_i32_0 = arith.constant 0 : i32
    return %arg0, %arg1, %c0_i32 : i32, i32, i32
  }
  func.func @transform_15(%arg0: i32, %arg1: i32) -> (i32, i32, i32) {
    %c0_i32 = arith.constant 0 : i32
    %c0_i32_0 = arith.constant 0 : i32
    return %arg0, %arg1, %c0_i32 : i32, i32, i32
  }
}

</mosaic_0001>

<llo_original>
// kernel: tpu_custom_call.1
$region0: #{tpu_custom_call.1}
  #allocation0 [shape = 'u32[]', space=smem, size = 0x4, offset = 0x4, fixed_abs, tag = 'smem constant byte address 0x4 - core index']
  #allocation1 [shape = 'u32[144,128]{1,0:T(1,128)}', space=vmem, size = 0x12000, scoped, tag = 'internal scratch']
  %s0 = inlined_call_operand.hbm [shape: f32[2,16,128], index: 0, kind: input, shape index: {}]
  %s1 = inlined_call_operand.hbm [shape: f32[2,128,128], index: 1, kind: input, shape index: {}]
  %s2 = inlined_call_operand.hbm [shape: f32[2,128,128], index: 2, kind: input, shape index: {}]
  %s3 = inlined_call_operand.hbm [shape: f32[2,16,128], index: 3, kind: input, shape index: {}]
  %s4 = inlined_call_operand.hbm [shape: f32[128,128], index: 4, kind: input, shape index: {}]
  %s5 = inlined_call_operand.hbm [shape: f32[128,128], index: 5, kind: input, shape index: {}]
  %s6 = inlined_call_operand.hbm [shape: f32[128,128], index: 6, kind: input, shape index: {}]
  %s7 = inlined_call_operand.hbm [shape: f32[128,128], index: 7, kind: input, shape index: {}]
  %s8 = inlined_call_operand.vmem [shape: f32[1,128], index: 8, kind: input, shape index: {}]
  %s9 = inlined_call_operand.vmem [shape: f32[1,128], index: 9, kind: input, shape index: {}]
  %s10 = inlined_call_operand.vmem [shape: f32[1,128], index: 10, kind: input, shape index: {}]
  %s11 = inlined_call_operand.vmem [shape: f32[1,128], index: 11, kind: input, shape index: {}]
  %s12 = inlined_call_operand.vmem [shape: f32[1,128], index: 12, kind: input, shape index: {}]
  %s13 = inlined_call_operand.vmem [shape: f32[1,128], index: 13, kind: input, shape index: {}]
  %s14 = inlined_call_operand.hbm [shape: f32[2,16,128], index: 14, kind: output, shape index: {0}]
  %s15 = inlined_call_operand.hbm [shape: f32[2,16,128], index: 15, kind: output, shape index: {1}]
  %16 = xla_tuple %s14, %s15
  %s17 = sld [smem:[#allocation0]]
  $region129: #{tpu_custom_call.1} parent=0
    _
  %s19 = ssub.s32 1, %s17
  %s20 = scalar_select 0, %s19, %s17
  $region1: #{tpu_custom_call.1} parent=0
    #allocation2 [shape = 'u8[16384]{0}', space=vmem, size = 0x4000, scoped, tag = 'input window, operand 0']
    #allocation3 [shape = 's32[2]{0}', space=sflag, size = 0x8, scoped, tag = 'scoped memory for tpu_custom_call.1']
    #allocation4 [shape = 's32[2]{0}', space=sflag, size = 0x8, scoped, tag = 'scoped memory for tpu_custom_call.1']
    #allocation5 [shape = 'u8[131072]{0}', space=vmem, size = 0x20000, scoped, tag = 'input window, operand 1']
    #allocation6 [shape = 's32[2]{0}', space=sflag, size = 0x8, scoped, tag = 'scoped memory for tpu_custom_call.1']
    #allocation7 [shape = 'u8[131072]{0}', space=vmem, size = 0x20000, scoped, tag = 'input window, operand 2']
    #allocation8 [shape = 'u8[16384]{0}', space=vmem, size = 0x4000, scoped, tag = 'input window, operand 3']
    #allocation9 [shape = 's32[2]{0}', space=sflag, size = 0x8, scoped, tag = 'scoped memory for tpu_custom_call.1']
    #allocation10 [shape = 'u8[65536]{0}', space=vmem, size = 0x10000, scoped, tag = 'input window, operand 4, single buffered']
    #allocation11 [shape = 'u8[65536]{0}', space=vmem, size = 0x10000, scoped, tag = 'input window, operand 5, single buffered']
    #allocation12 [shape = 's32[1]{0}', space=sflag, size = 0x4, scoped, tag = 'scoped memory for tpu_custom_call.1']
    #allocation13 [shape = 'u8[65536]{0}', space=vmem, size = 0x10000, scoped, tag = 'input window, operand 6, single buffered']
    #allocation14 [shape = 'u8[65536]{0}', space=vmem, size = 0x10000, scoped, tag = 'input window, operand 7, single buffered']
    #allocation15 [shape = 's32[1]{0}', space=sflag, size = 0x4, scoped, tag = 'scoped memory for tpu_custom_call.1']
    #allocation16 [shape = 'u8[16384]{0}', space=vmem, size = 0x4000, scoped, tag = 'output window, operand 0']
    #allocation17 [shape = 'u8[16384]{0}', space=vmem, size = 0x4000, scoped, tag = 'output window, operand 1']
    #allocation18 [shape = 's32[2]{0}', space=sflag, size = 0x8, scoped, tag = 'scoped memory for tpu_custom_call.1']
    %21 = vsyncpa [#allocation3], 0
    %s22 = scalar_lea.sflag [#allocation3], 1
    %23 = vsyncpa %s22, 0
    %24 = vsyncpa [#allocation6], 0
    %s25 = scalar_lea.sflag [#allocation6], 1
    %26 = vsyncpa %s25, 0
    %27 = vsyncpa [#allocation9], 0
    %s28 = scalar_lea.sflag [#allocation9], 1
    %29 = vsyncpa %s28, 0
    %30 = vsyncpa [#allocation12], 0
    %31 = vsyncpa [#allocation15], 0
    %32 = vsyncpa [#allocation4], 0
    %s33 = scalar_lea.sflag [#allocation4], 1
    %34 = vsyncpa %s33, 0
    %35 = vsyncpa [#allocation18], 0
    %s36 = scalar_lea.sflag [#allocation18], 1
    %37 = vsyncpa %s36, 0
    loop: start=0, step=1, limit=4
    $region2: #{tpu_custom_call.1} parent=1 // loop_pre_header
      _
    $region3: #{tpu_custom_call.1} parent=1 // loop_header
      %s39 = sphi 0, %s43
      %p40 = scmp.ge.s32.totalorder %s39, 4
      %s46 = sphi 0, %s58
      %s47 = sphi 0, %s54
      %s48 = sphi 0, %s46
      %s49 = sphi 0, %s47
      %s50 = sphi 0, %s48
      %s51 = sphi 0, %s49
      %s63 = sphi 0, %s65
      %s66 = sphi 0, %s63
      %s67 = sphi 0, %s66
      %s83 = sphi 0, %s67
      %s89 = sphi 0, %s91
      %s92 = sphi 0, %s89
      %s93 = sphi 0, %s92
      %s109 = sphi 0, %s93
      %s115 = sphi 0, %s117
      %s118 = sphi 0, %s115
      %s119 = sphi 0, %s118
      %s135 = sphi 0, %s119
      %s143 = sphi 0, %s145
      %s146 = sphi 0, %s143
      %s147 = sphi 0, %s146
      %s163 = sphi 0, %s147
      %s167 = sphi 0, %s167
      %s169 = sphi 0, %s167
      %s170 = sphi 0, %s169
      %s184 = sphi 0, %s170
      %s188 = sphi 0, %s188
      %s190 = sphi 0, %s188
      %s191 = sphi 0, %s190
      %s205 = sphi 0, %s191
      %s209 = sphi 0, %s209
      %s211 = sphi 0, %s209
      %s212 = sphi 0, %s211
      %s226 = sphi 0, %s212
      %s230 = sphi 0, %s230
      %s232 = sphi 0, %s230
      %s233 = sphi 0, %s232
      %s247 = sphi 0, %s233
      %s251 = sphi 0, %s251
      %s253 = sphi 0, %s251
      %s254 = sphi 0, %s253
      %s268 = sphi 0, %s254
      %s272 = sphi 0, %s272
      %s274 = sphi 0, %s272
      %s275 = sphi 0, %s274
      %s289 = sphi 0, %s275
      %s293 = sphi 0, %s293
      %s295 = sphi 0, %s293
      %s296 = sphi 0, %s295
      %s310 = sphi 0, %s296
      %s314 = sphi 0, %s314
      %s316 = sphi 0, %s314
      %s317 = sphi 0, %s316
      %s331 = sphi 0, %s317
      %s335 = sphi 0, %s335
      %s337 = sphi 0, %s335
      %s338 = sphi 0, %s337
      %s352 = sphi 0, %s338
      %s356 = sphi 0, %s356
      %s358 = sphi 0, %s356
      %s359 = sphi 0, %s358
      %s373 = sphi 0, %s359
      %s381 = sphi 0, %s383
      %s384 = sphi 0, %s381
      %s385 = sphi 0, %s384
      %s401 = sphi 0, %s385
      %s409 = sphi 0, %s411
      %s412 = sphi 0, %s409
      %s413 = sphi 0, %s412
      %s429 = sphi 0, %s413
    $region4: #{tpu_custom_call.1} parent=1 // loop_header_branch
      %42 = sbr.rel (%p40) target = $region8
    $region5: #{tpu_custom_call.1} parent=1 // loop_body
      %s44 = ssub.s32 %s39, 1
      %s45 = ssub.s32 %s39, 2
      %s52 = sadd.s32 1, %s47
      %p53 = scmp.ge.s32.totalorder %s52, 1
      %s54 = scalar_select %p53, 0, %s52
      %s55 = sadd.s32 1, %s46
      %s56 = scalar_select %p53, %s55, %s46
      %p57 = scmp.ge.s32.totalorder %s56, 2
      %s58 = scalar_select %p57, 0, %s56
      %s59 = ssub.s32 %s46, %s58
      %s60 = ssub.s32 %s47, %s54
      %s61 = sor.u32 %s59, %s60
      %p62 = scmp.eq.s32.totalorder %s61, 0
      %s64 = sadd.s32 %s63, 1
      %s65 = scalar_select %p62, %s63, %s64
      %p68 = pneg %p62
      %p69 = scmp.eq.s32.totalorder %s39, 1
      %p70 = por %p68, %p69
      %p71 = scmp.ne.s32.totalorder %s63, %s66
      %p72 = scmp.eq.s32.totalorder %s39, 0
      %p73 = por %p71, %p72
      %p74 = scmp.ne.s32.totalorder %s63, %s66
      %p75 = scmp.eq.s32.totalorder %s44, 1
      %p76 = por %p74, %p75
      %p77 = scmp.ne.s32.totalorder %s66, %s67
      %p78 = scmp.eq.s32.totalorder %s44, 0
      %p79 = por %p77, %p78
      %p80 = scmp.ne.s32.totalorder %s66, %s67
      %p81 = scmp.eq.s32.totalorder %s45, 1
      %p82 = por %p80, %p81
      %p84 = scmp.ne.s32.totalorder %s67, %s83
      %p85 = scmp.eq.s32.totalorder %s45, 0
      %p86 = por %p84, %p85
      %s87 = ssub.s32 %s46, %s58
      %p88 = scmp.eq.s32.totalorder %s87, 0
      %s90 = sadd.s32 %s89, 1
      %s91 = scalar_select %p88, %s89, %s90
      %p94 = pneg %p88
      %p95 = scmp.eq.s32.totalorder %s39, 1
      %p96 = por %p94, %p95
      %p97 = scmp.ne.s32.totalorder %s89, %s92
      %p98 = scmp.eq.s32.totalorder %s39, 0
      %p99 = por %p97, %p98
      %p100 = scmp.ne.s32.totalorder %s89, %s92
      %p101 = scmp.eq.s32.totalorder %s44, 1
      %p102 = por %p100, %p101
      %p103 = scmp.ne.s32.totalorder %s92, %s93
      %p104 = scmp.eq.s32.totalorder %s44, 0
      %p105 = por %p103, %p104
      %p106 = scmp.ne.s32.totalorder %s92, %s93
      %p107 = scmp.eq.s32.totalorder %s45, 1
      %p108 = por %p106, %p107
      %p110 = scmp.ne.s32.totalorder %s93, %s109
      %p111 = scmp.eq.s32.totalorder %s45, 0
      %p112 = por %p110, %p111
      %s113 = ssub.s32 %s46, %s58
      %p114 = scmp.eq.s32.totalorder %s113, 0
      %s116 = sadd.s32 %s115, 1
      %s117 = scalar_select %p114, %s115, %s116
      %p120 = pneg %p114
      %p121 = scmp.eq.s32.totalorder %s39, 1
      %p122 = por %p120, %p121
      %p123 = scmp.ne.s32.totalorder %s115, %s118
      %p124 = scmp.eq.s32.totalorder %s39, 0
      %p125 = por %p123, %p124
      %p126 = scmp.ne.s32.totalorder %s115, %s118
      %p127 = scmp.eq.s32.totalorder %s44, 1
      %p128 = por %p126, %p127
      %p129 = scmp.ne.s32.totalorder %s118, %s119
      %p130 = scmp.eq.s32.totalorder %s44, 0
      %p131 = por %p129, %p130
      %p132 = scmp.ne.s32.totalorder %s118, %s119
      %p133 = scmp.eq.s32.totalorder %s45, 1
      %p134 = por %p132, %p133
      %p136 = scmp.ne.s32.totalorder %s119, %s135
      %p137 = scmp.eq.s32.totalorder %s45, 0
      %p138 = por %p136, %p137
      %s139 = ssub.s32 %s46, %s58
      %s140 = ssub.s32 %s47, %s54
      %s141 = sor.u32 %s139, %s140
      %p142 = scmp.eq.s32.totalorder %s141, 0
      %s144 = sadd.s32 %s143, 1
      %s145 = scalar_select %p142, %s143, %s144
      %p148 = pneg %p142
      %p149 = scmp.eq.s32.totalorder %s39, 1
      %p150 = por %p148, %p149
      %p151 = scmp.ne.s32.totalorder %s143, %s146
      %p152 = scmp.eq.s32.totalorder %s39, 0
      %p153 = por %p151, %p152
      %p154 = scmp.ne.s32.totalorder %s143, %s146
      %p155 = scmp.eq.s32.totalorder %s44, 1
      %p156 = por %p154, %p155
      %p157 = scmp.ne.s32.totalorder %s146, %s147
      %p158 = scmp.eq.s32.totalorder %s44, 0
      %p159 = por %p157, %p158
      %p160 = scmp.ne.s32.totalorder %s146, %s147
      %p161 = scmp.eq.s32.totalorder %s45, 1
      %p162 = por %p160, %p161
      %p164 = scmp.ne.s32.totalorder %s147, %s163
      %p165 = scmp.eq.s32.totalorder %s45, 0
      %p166 = por %p164, %p165
      %s168 = sadd.s32 %s167, 1
      %p171 = scmp.eq.s32.totalorder %s39, 1
      %p172 = scmp.ne.s32.totalorder %s167, %s169
      %p173 = scmp.eq.s32.totalorder %s39, 0
      %p174 = por %p172, %p173
      %p175 = scmp.ne.s32.totalorder %s167, %s169
      %p176 = scmp.eq.s32.totalorder %s44, 1
      %p177 = por %p175, %p176
      %p178 = scmp.ne.s32.totalorder %s169, %s170
      %p179 = scmp.eq.s32.totalorder %s44, 0
      %p180 = por %p178, %p179
      %p181 = scmp.ne.s32.totalorder %s169, %s170
      %p182 = scmp.eq.s32.totalorder %s45, 1
      %p183 = por %p181, %p182
      %p185 = scmp.ne.s32.totalorder %s170, %s184
      %p186 = scmp.eq.s32.totalorder %s45, 0
      %p187 = por %p185, %p186
      %s189 = sadd.s32 %s188, 1
      %p192 = scmp.eq.s32.totalorder %s39, 1
      %p193 = scmp.ne.s32.totalorder %s188, %s190
      %p194 = scmp.eq.s32.totalorder %s39, 0
      %p195 = por %p193, %p194
      %p196 = scmp.ne.s32.totalorder %s188, %s190
      %p197 = scmp.eq.s32.totalorder %s44, 1
      %p198 = por %p196, %p197
      %p199 = scmp.ne.s32.totalorder %s190, %s191
      %p200 = scmp.eq.s32.totalorder %s44, 0
      %p201 = por %p199, %p200
      %p202 = scmp.ne.s32.totalorder %s190, %s191
      %p203 = scmp.eq.s32.totalorder %s45, 1
      %p204 = por %p202, %p203
      %p206 = scmp.ne.s32.totalorder %s191, %s205
      %p207 = scmp.eq.s32.totalorder %s45, 0
      %p208 = por %p206, %p207
      %s210 = sadd.s32 %s209, 1
      %p213 = scmp.eq.s32.totalorder %s39, 1
      %p214 = scmp.ne.s32.totalorder %s209, %s211
      %p215 = scmp.eq.s32.totalorder %s39, 0
      %p216 = por %p214, %p215
      %p217 = scmp.ne.s32.totalorder %s209, %s211
      %p218 = scmp.eq.s32.totalorder %s44, 1
      %p219 = por %p217, %p218
      %p220 = scmp.ne.s32.totalorder %s211, %s212
      %p221 = scmp.eq.s32.totalorder %s44, 0
      %p222 = por %p220, %p221
      %p223 = scmp.ne.s32.totalorder %s211, %s212
      %p224 = scmp.eq.s32.totalorder %s45, 1
      %p225 = por %p223, %p224
      %p227 = scmp.ne.s32.totalorder %s212, %s226
      %p228 = scmp.eq.s32.totalorder %s45, 0
      %p229 = por %p227, %p228
      %s231 = sadd.s32 %s230, 1
      %p234 = scmp.eq.s32.totalorder %s39, 1
      %p235 = scmp.ne.s32.totalorder %s230, %s232
      %p236 = scmp.eq.s32.totalorder %s39, 0
      %p237 = por %p235, %p236
      %p238 = scmp.ne.s32.totalorder %s230, %s232
      %p239 = scmp.eq.s32.totalorder %s44, 1
      %p240 = por %p238, %p239
      %p241 = scmp.ne.s32.totalorder %s232, %s233
      %p242 = scmp.eq.s32.totalorder %s44, 0
      %p243 = por %p241, %p242
      %p244 = scmp.ne.s32.totalorder %s232, %s233
      %p245 = scmp.eq.s32.totalorder %s45, 1
      %p246 = por %p244, %p245
      %p248 = scmp.ne.s32.totalorder %s233, %s247
      %p249 = scmp.eq.s32.totalorder %s45, 0
      %p250 = por %p248, %p249
      %s252 = sadd.s32 %s251, 1
      %p255 = scmp.eq.s32.totalorder %s39, 1
      %p256 = scmp.ne.s32.totalorder %s251, %s253
      %p257 = scmp.eq.s32.totalorder %s39, 0
      %p258 = por %p256, %p257
      %p259 = scmp.ne.s32.totalorder %s251, %s253
      %p260 = scmp.eq.s32.totalorder %s44, 1
      %p261 = por %p259, %p260
      %p262 = scmp.ne.s32.totalorder %s253, %s254
      %p263 = scmp.eq.s32.totalorder %s44, 0
      %p264 = por %p262, %p263
      %p265 = scmp.ne.s32.totalorder %s253, %s254
      %p266 = scmp.eq.s32.totalorder %s45, 1
      %p267 = por %p265, %p266
      %p269 = scmp.ne.s32.totalorder %s254, %s268
      %p270 = scmp.eq.s32.totalorder %s45, 0
      %p271 = por %p269, %p270
      %s273 = sadd.s32 %s272, 1
      %p276 = scmp.eq.s32.totalorder %s39, 1
      %p277 = scmp.ne.s32.totalorder %s272, %s274
      %p278 = scmp.eq.s32.totalorder %s39, 0
      %p279 = por %p277, %p278
      %p280 = scmp.ne.s32.totalorder %s272, %s274
      %p281 = scmp.eq.s32.totalorder %s44, 1
      %p282 = por %p280, %p281
      %p283 = scmp.ne.s32.totalorder %s274, %s275
      %p284 = scmp.eq.s32.totalorder %s44, 0
      %p285 = por %p283, %p284
      %p286 = scmp.ne.s32.totalorder %s274, %s275
      %p287 = scmp.eq.s32.totalorder %s45, 1
      %p288 = por %p286, %p287
      %p290 = scmp.ne.s32.totalorder %s275, %s289
      %p291 = scmp.eq.s32.totalorder %s45, 0
      %p292 = por %p290, %p291
      %s294 = sadd.s32 %s293, 1
      %p297 = scmp.eq.s32.totalorder %s39, 1
      %p298 = scmp.ne.s32.totalorder %s293, %s295
      %p299 = scmp.eq.s32.totalorder %s39, 0
      %p300 = por %p298, %p299
      %p301 = scmp.ne.s32.totalorder %s293, %s295
      %p302 = scmp.eq.s32.totalorder %s44, 1
      %p303 = por %p301, %p302
      %p304 = scmp.ne.s32.totalorder %s295, %s296
      %p305 = scmp.eq.s32.totalorder %s44, 0
      %p306 = por %p304, %p305
      %p307 = scmp.ne.s32.totalorder %s295, %s296
      %p308 = scmp.eq.s32.totalorder %s45, 1
      %p309 = por %p307, %p308
      %p311 = scmp.ne.s32.totalorder %s296, %s310
      %p312 = scmp.eq.s32.totalorder %s45, 0
      %p313 = por %p311, %p312
      %s315 = sadd.s32 %s314, 1
      %p318 = scmp.eq.s32.totalorder %s39, 1
      %p319 = scmp.ne.s32.totalorder %s314, %s316
      %p320 = scmp.eq.s32.totalorder %s39, 0
      %p321 = por %p319, %p320
      %p322 = scmp.ne.s32.totalorder %s314, %s316
      %p323 = scmp.eq.s32.totalorder %s44, 1
      %p324 = por %p322, %p323
      %p325 = scmp.ne.s32.totalorder %s316, %s317
      %p326 = scmp.eq.s32.totalorder %s44, 0
      %p327 = por %p325, %p326
      %p328 = scmp.ne.s32.totalorder %s316, %s317
      %p329 = scmp.eq.s32.totalorder %s45, 1
      %p330 = por %p328, %p329
      %p332 = scmp.ne.s32.totalorder %s317, %s331
      %p333 = scmp.eq.s32.totalorder %s45, 0
      %p334 = por %p332, %p333
      %s336 = sadd.s32 %s335, 1
      %p339 = scmp.eq.s32.totalorder %s39, 1
      %p340 = scmp.ne.s32.totalorder %s335, %s337
      %p341 = scmp.eq.s32.totalorder %s39, 0
      %p342 = por %p340, %p341
      %p343 = scmp.ne.s32.totalorder %s335, %s337
      %p344 = scmp.eq.s32.totalorder %s44, 1
      %p345 = por %p343, %p344
      %p346 = scmp.ne.s32.totalorder %s337, %s338
      %p347 = scmp.eq.s32.totalorder %s44, 0
      %p348 = por %p346, %p347
      %p349 = scmp.ne.s32.totalorder %s337, %s338
      %p350 = scmp.eq.s32.totalorder %s45, 1
      %p351 = por %p349, %p350
      %p353 = scmp.ne.s32.totalorder %s338, %s352
      %p354 = scmp.eq.s32.totalorder %s45, 0
      %p355 = por %p353, %p354
      %s357 = sadd.s32 %s356, 1
      %p360 = scmp.eq.s32.totalorder %s39, 1
      %p361 = scmp.ne.s32.totalorder %s356, %s358
      %p362 = scmp.eq.s32.totalorder %s39, 0
      %p363 = por %p361, %p362
      %p364 = scmp.ne.s32.totalorder %s356, %s358
      %p365 = scmp.eq.s32.totalorder %s44, 1
      %p366 = por %p364, %p365
      %p367 = scmp.ne.s32.totalorder %s358, %s359
      %p368 = scmp.eq.s32.totalorder %s44, 0
      %p369 = por %p367, %p368
      %p370 = scmp.ne.s32.totalorder %s358, %s359
      %p371 = scmp.eq.s32.totalorder %s45, 1
      %p372 = por %p370, %p371
      %p374 = scmp.ne.s32.totalorder %s359, %s373
      %p375 = scmp.eq.s32.totalorder %s45, 0
      %p376 = por %p374, %p375
      %s377 = ssub.s32 %s46, %s58
      %s378 = ssub.s32 %s47, %s54
      %s379 = sor.u32 %s377, %s378
      %p380 = scmp.eq.s32.totalorder %s379, 0
      %s382 = sadd.s32 %s381, 1
      %s383 = scalar_select %p380, %s381, %s382
      %p386 = pneg %p380
      %p387 = scmp.eq.s32.totalorder %s39, 1
      %p388 = por %p386, %p387
      %p389 = scmp.ne.s32.totalorder %s381, %s384
      %p390 = scmp.eq.s32.totalorder %s39, 0
      %p391 = por %p389, %p390
      %p392 = scmp.ne.s32.totalorder %s381, %s384
      %p393 = scmp.eq.s32.totalorder %s44, 1
      %p394 = por %p392, %p393
      %p395 = scmp.ne.s32.totalorder %s384, %s385
      %p396 = scmp.eq.s32.totalorder %s44, 0
      %p397 = por %p395, %p396
      %p398 = scmp.ne.s32.totalorder %s384, %s385
      %p399 = scmp.eq.s32.totalorder %s45, 1
      %p400 = por %p398, %p399
      %p402 = scmp.ne.s32.totalorder %s385, %s401
      %p403 = scmp.eq.s32.totalorder %s45, 0
      %p404 = por %p402, %p403
      %s405 = ssub.s32 %s46, %s58
      %s406 = ssub.s32 %s47, %s54
      %s407 = sor.u32 %s405, %s406
      %p408 = scmp.eq.s32.totalorder %s407, 0
      %s410 = sadd.s32 %s409, 1
      %s411 = scalar_select %p408, %s409, %s410
      %p414 = pneg %p408
      %p415 = scmp.eq.s32.totalorder %s39, 1
      %p416 = por %p414, %p415
      %p417 = scmp.ne.s32.totalorder %s409, %s412
      %p418 = scmp.eq.s32.totalorder %s39, 0
      %p419 = por %p417, %p418
      %p420 = scmp.ne.s32.totalorder %s409, %s412
      %p421 = scmp.eq.s32.totalorder %s44, 1
      %p422 = por %p420, %p421
      %p423 = scmp.ne.s32.totalorder %s412, %s413
      %p424 = scmp.eq.s32.totalorder %s44, 0
      %p425 = por %p423, %p424
      %p426 = scmp.ne.s32.totalorder %s412, %s413
      %p427 = scmp.eq.s32.totalorder %s45, 1
      %p428 = por %p426, %p427
      %p430 = scmp.ne.s32.totalorder %s413, %s429
      %p431 = scmp.eq.s32.totalorder %s45, 0
      %p432 = por %p430, %p431
      %p433 = scmp.le.s32.totalorder 1, %s39
      %p434 = scmp.lt.s32.totalorder %s39, 3
      %p435 = pnand %p433, %p434
      %p436 = pneg %p435
      // Predicated region
      $region9: #{tpu_custom_call.1} parent=5 // pred_check
        _
      $region10: #{tpu_custom_call.1} parent=5 // pred_check_branch
        %438 = sbr.rel (%p435) target = $region12
      $region11: #{tpu_custom_call.1} parent=5 // pred_region
        %s439 = ssub.s32 %s39, 1
        // Predicated region
        $region13: #{tpu_custom_call.1} parent=11 // pred_check
          %p440 = pneg %p180
        $region14: #{tpu_custom_call.1} parent=11 // pred_check_branch
          %442 = sbr.rel (%p440) target = $region16
        $region15: #{tpu_custom_call.1} parent=11 // pred_region
          %s444 = ssub.s32 2048, 2048
          %445 = vsyncadd [#allocation9], %s444
          %s446 = sshll.u32 [#allocation10], 4
          %s447 = int_to_ptr.vmem [resolvable:$true] %s446
          %452 = dma.hbm_to_vmem [thread:$0]  %s4, 2048, %s447, [#allocation9], 128, 128, 8
        $region16: #{tpu_custom_call.1} parent=11 // pred_fallthru
          _
        // Predicated region
        $region17: #{tpu_custom_call.1} parent=11 // pred_check
          %p453 = pneg %p201
        $region18: #{tpu_custom_call.1} parent=11 // pred_check_branch
          %455 = sbr.rel (%p453) target = $region20
        $region19: #{tpu_custom_call.1} parent=11 // pred_region
          %s457 = ssub.s32 2048, 2048
          %458 = vsyncadd [#allocation12], %s457
          %s459 = sshll.u32 [#allocation11], 4
          %s460 = int_to_ptr.vmem [resolvable:$true] %s459
          %465 = dma.hbm_to_vmem [thread:$0]  %s5, 2048, %s460, [#allocation12], 128, 128, 8
        $region20: #{tpu_custom_call.1} parent=11 // pred_fallthru
          _
        // Predicated region
        $region21: #{tpu_custom_call.1} parent=11 // pred_check
          %p466 = pneg %p222
        $region22: #{tpu_custom_call.1} parent=11 // pred_check_branch
          %468 = sbr.rel (%p466) target = $region24
        $region23: #{tpu_custom_call.1} parent=11 // pred_region
          %s470 = ssub.s32 2048, 2048
          %471 = vsyncadd [#allocation12], %s470
          %s472 = sshll.u32 [#allocation13], 4
          %s473 = int_to_ptr.vmem [resolvable:$true] %s472
          %478 = dma.hbm_to_vmem [thread:$0]  %s6, 2048, %s473, [#allocation12], 128, 128, 8
        $region24: #{tpu_custom_call.1} parent=11 // pred_fallthru
          _
        // Predicated region
        $region25: #{tpu_custom_call.1} parent=11 // pred_check
          %p479 = pneg %p243
        $region26: #{tpu_custom_call.1} parent=11 // pred_check_branch
          %481 = sbr.rel (%p479) target = $region28
        $region27: #{tpu_custom_call.1} parent=11 // pred_region
          %s483 = ssub.s32 2048, 2048
          %484 = vsyncadd [#allocation15], %s483
          %s485 = sshll.u32 [#allocation14], 4
          %s486 = int_to_ptr.vmem [resolvable:$true] %s485
          %491 = dma.hbm_to_vmem [thread:$0]  %s7, 2048, %s486, [#allocation15], 128, 128, 8
        $region28: #{tpu_custom_call.1} parent=11 // pred_fallthru
          _
        // Predicated region
        $region29: #{tpu_custom_call.1} parent=11 // pred_check
          %p492 = pneg %p264
        $region30: #{tpu_custom_call.1} parent=11 // pred_check_branch
          %494 = sbr.rel (%p492) target = $region32
        $region31: #{tpu_custom_call.1} parent=11 // pred_region
          _
        $region32: #{tpu_custom_call.1} parent=11 // pred_fallthru
          _
        // Predicated region
        $region33: #{tpu_custom_call.1} parent=11 // pred_check
          %p495 = pneg %p285
        $region34: #{tpu_custom_call.1} parent=11 // pred_check_branch
          %497 = sbr.rel (%p495) target = $region36
        $region35: #{tpu_custom_call.1} parent=11 // pred_region
          _
        $region36: #{tpu_custom_call.1} parent=11 // pred_fallthru
          _
        // Predicated region
        $region37: #{tpu_custom_call.1} parent=11 // pred_check
          %p498 = pneg %p306
        $region38: #{tpu_custom_call.1} parent=11 // pred_check_branch
          %500 = sbr.rel (%p498) target = $region40
        $region39: #{tpu_custom_call.1} parent=11 // pred_region
          _
        $region40: #{tpu_custom_call.1} parent=11 // pred_fallthru
          _
        // Predicated region
        $region41: #{tpu_custom_call.1} parent=11 // pred_check
          %p501 = pneg %p327
        $region42: #{tpu_custom_call.1} parent=11 // pred_check_branch
          %503 = sbr.rel (%p501) target = $region44
        $region43: #{tpu_custom_call.1} parent=11 // pred_region
          _
        $region44: #{tpu_custom_call.1} parent=11 // pred_fallthru
          _
        // Predicated region
        $region45: #{tpu_custom_call.1} parent=11 // pred_check
          %p504 = pneg %p348
        $region46: #{tpu_custom_call.1} parent=11 // pred_check_branch
          %506 = sbr.rel (%p504) target = $region48
        $region47: #{tpu_custom_call.1} parent=11 // pred_region
          _
        $region48: #{tpu_custom_call.1} parent=11 // pred_fallthru
          _
        // Predicated region
        $region49: #{tpu_custom_call.1} parent=11 // pred_check
          %p507 = pneg %p369
        $region50: #{tpu_custom_call.1} parent=11 // pred_check_branch
          %509 = sbr.rel (%p507) target = $region52
        $region51: #{tpu_custom_call.1} parent=11 // pred_region
          _
        $region52: #{tpu_custom_call.1} parent=11 // pred_fallthru
          _
      $region12: #{tpu_custom_call.1} parent=5 // pred_fallthru
        _
      %p510 = scmp.lt.s32.totalorder %s39, 2
      // Predicated region
      $region53: #{tpu_custom_call.1} parent=5 // pred_check
        %p511 = pneg %p510
      $region54: #{tpu_custom_call.1} parent=5 // pred_check_branch
        %513 = sbr.rel (%p511) target = $region56
      $region55: #{tpu_custom_call.1} parent=5 // pred_region
        // Predicated region
        $region57: #{tpu_custom_call.1} parent=55 // pred_check
          %p514 = pneg %p73
        $region58: #{tpu_custom_call.1} parent=55 // pred_check_branch
          %516 = sbr.rel (%p514) target = $region60
        $region59: #{tpu_custom_call.1} parent=55 // pred_region
          %s517 = sand.u32 %s63, 1
          %s518 = scalar_lea.sflag [#allocation3], %s517
          %s519 = sand.u32 %s63, 1
          %s520 = smul.addr %s519, 16
          %s521 = scalar_lea.vmem [#allocation2], %s520
          %s522 = smul.u32 2, %s47
          %s524 = ssub.s32 256, 256
          %525 = vsyncadd %s518, %s524
          %s526 = smul.addr %s46, 2
          %s527 = sadd.s32 %s522, %s526
          %s528 = smul.addr %s527, 128
          %s529 = scalar_lea.hbm %s0, %s528
          %s530 = sshll.u32 %s521, 4
          %s531 = int_to_ptr.vmem [resolvable:$true] %s530
          %536 = dma.hbm_to_vmem [thread:$0]  %s529, 256, %s531, %s518, 128, 128, 8
        $region60: #{tpu_custom_call.1} parent=55 // pred_fallthru
          _
        // Predicated region
        $region61: #{tpu_custom_call.1} parent=55 // pred_check
          %p537 = pneg %p99
        $region62: #{tpu_custom_call.1} parent=55 // pred_check_branch
          %539 = sbr.rel (%p537) target = $region64
        $region63: #{tpu_custom_call.1} parent=55 // pred_region
          %s540 = sand.u32 %s39, 1
          %s541 = scalar_lea.sflag [#allocation6], %s540
          %s542 = sand.u32 %s89, 1
          %s543 = smul.addr %s542, 128
          %s544 = scalar_lea.vmem [#allocation5], %s543
          %s546 = ssub.s32 2048, 2048
          %547 = vsyncadd %s541, %s546
          %s548 = smul.addr %s46, 16
          %s549 = smul.addr %s548, 128
          %s550 = scalar_lea.hbm %s1, %s549
          %s551 = sshll.u32 %s544, 4
          %s552 = int_to_ptr.vmem [resolvable:$true] %s551
          %557 = dma.hbm_to_vmem [thread:$0]  %s550, 2048, %s552, %s541, 128, 128, 8
        $region64: #{tpu_custom_call.1} parent=55 // pred_fallthru
          _
        // Predicated region
        $region65: #{tpu_custom_call.1} parent=55 // pred_check
          %p558 = pneg %p125
        $region66: #{tpu_custom_call.1} parent=55 // pred_check_branch
          %560 = sbr.rel (%p558) target = $region68
        $region67: #{tpu_custom_call.1} parent=55 // pred_region
          %s561 = sand.u32 %s39, 1
          %s562 = scalar_lea.sflag [#allocation6], %s561
          %s563 = sand.u32 %s115, 1
          %s564 = smul.addr %s563, 128
          %s565 = scalar_lea.vmem [#allocation7], %s564
          %s567 = ssub.s32 2048, 2048
          %568 = vsyncadd %s562, %s567
          %s569 = smul.addr %s46, 16
          %s570 = smul.addr %s569, 128
          %s571 = scalar_lea.hbm %s2, %s570
          %s572 = sshll.u32 %s565, 4
          %s573 = int_to_ptr.vmem [resolvable:$true] %s572
          %578 = dma.hbm_to_vmem [thread:$0]  %s571, 2048, %s573, %s562, 128, 128, 8
        $region68: #{tpu_custom_call.1} parent=55 // pred_fallthru
          _
        // Predicated region
        $region69: #{tpu_custom_call.1} parent=55 // pred_check
          %p579 = pneg %p153
        $region70: #{tpu_custom_call.1} parent=55 // pred_check_branch
          %581 = sbr.rel (%p579) target = $region72
        $region71: #{tpu_custom_call.1} parent=55 // pred_region
          %s582 = sand.u32 %s39, 1
          %s583 = scalar_lea.sflag [#allocation9], %s582
          %s584 = sand.u32 %s143, 1
          %s585 = smul.addr %s584, 16
          %s586 = scalar_lea.vmem [#allocation8], %s585
          %s587 = smul.u32 2, %s47
          %s589 = ssub.s32 256, 256
          %590 = vsyncadd %s583, %s589
          %s591 = smul.addr %s46, 2
          %s592 = sadd.s32 %s587, %s591
          %s593 = smul.addr %s592, 128
          %s594 = scalar_lea.hbm %s3, %s593
          %s595 = sshll.u32 %s586, 4
          %s596 = int_to_ptr.vmem [resolvable:$true] %s595
          %601 = dma.hbm_to_vmem [thread:$0]  %s594, 256, %s596, %s583, 128, 128, 8
        $region72: #{tpu_custom_call.1} parent=55 // pred_fallthru
          _
      $region56: #{tpu_custom_call.1} parent=5 // pred_fallthru
        _
      %p602 = scmp.le.s32.totalorder 1, %s39
      %p603 = scmp.lt.s32.totalorder %s39, 3
      %p604 = pnand %p602, %p603
      %p605 = pneg %p604
      // Predicated region
      $region73: #{tpu_custom_call.1} parent=5 // pred_check
        _
      $region74: #{tpu_custom_call.1} parent=5 // pred_check_branch
        %607 = sbr.rel (%p604) target = $region76
      $region75: #{tpu_custom_call.1} parent=5 // pred_region
        %s608 = ssub.s32 %s39, 1
        %s609 = sand.u32 %s66, 1
        %s610 = scalar_lea.sflag [#allocation3], %s609
        %s611 = sand.u32 %s66, 1
        %s612 = smul.addr %s611, 16
        %s613 = scalar_lea.vmem [#allocation2], %s612
        // Predicated region
        $region77: #{tpu_custom_call.1} parent=75 // pred_check
          %p614 = pneg %p79
        $region78: #{tpu_custom_call.1} parent=75 // pred_check_branch
          %616 = sbr.rel (%p614) target = $region80
        $region79: #{tpu_custom_call.1} parent=75 // pred_region
          %617 = dma.done %s610, 256
        $region80: #{tpu_custom_call.1} parent=75 // pred_fallthru
          _
        %s618 = sand.u32 %s44, 1
        %s619 = scalar_lea.sflag [#allocation6], %s618
        %s620 = sand.u32 %s92, 1
        %s621 = smul.addr %s620, 128
        %s622 = scalar_lea.vmem [#allocation5], %s621
        // Predicated region
        $region81: #{tpu_custom_call.1} parent=75 // pred_check
          %p623 = pneg %p105
        $region82: #{tpu_custom_call.1} parent=75 // pred_check_branch
          %625 = sbr.rel (%p623) target = $region84
        $region83: #{tpu_custom_call.1} parent=75 // pred_region
          %626 = dma.done %s619, 2048
        $region84: #{tpu_custom_call.1} parent=75 // pred_fallthru
          _
        %s627 = sand.u32 %s44, 1
        %s628 = scalar_lea.sflag [#allocation6], %s627
        %s629 = sand.u32 %s118, 1
        %s630 = smul.addr %s629, 128
        %s631 = scalar_lea.vmem [#allocation7], %s630
        // Predicated region
        $region85: #{tpu_custom_call.1} parent=75 // pred_check
          %p632 = pneg %p131
        $region86: #{tpu_custom_call.1} parent=75 // pred_check_branch
          %634 = sbr.rel (%p632) target = $region88
        $region87: #{tpu_custom_call.1} parent=75 // pred_region
          %635 = dma.done %s628, 2048
        $region88: #{tpu_custom_call.1} parent=75 // pred_fallthru
          _
        %s636 = sand.u32 %s44, 1
        %s637 = scalar_lea.sflag [#allocation9], %s636
        %s638 = sand.u32 %s146, 1
        %s639 = smul.addr %s638, 16
        %s640 = scalar_lea.vmem [#allocation8], %s639
        // Predicated region
        $region89: #{tpu_custom_call.1} parent=75 // pred_check
          %p641 = pneg %p159
        $region90: #{tpu_custom_call.1} parent=75 // pred_check_branch
          %643 = sbr.rel (%p641) target = $region92
        $region91: #{tpu_custom_call.1} parent=75 // pred_region
          %644 = dma.done %s637, 256
        $region92: #{tpu_custom_call.1} parent=75 // pred_fallthru
          _
        // Predicated region
        $region93: #{tpu_custom_call.1} parent=75 // pred_check
          %p645 = pneg %p180
        $region94: #{tpu_custom_call.1} parent=75 // pred_check_branch
          %647 = sbr.rel (%p645) target = $region96
        $region95: #{tpu_custom_call.1} parent=75 // pred_region
          %648 = dma.done [#allocation9], 2048
        $region96: #{tpu_custom_call.1} parent=75 // pred_fallthru
          _
        // Predicated region
        $region97: #{tpu_custom_call.1} parent=75 // pred_check
          %p649 = pneg %p201
        $region98: #{tpu_custom_call.1} parent=75 // pred_check_branch
          %651 = sbr.rel (%p649) target = $region100
        $region99: #{tpu_custom_call.1} parent=75 // pred_region
          %652 = dma.done [#allocation12], 2048
        $region100: #{tpu_custom_call.1} parent=75 // pred_fallthru
          _
        // Predicated region
        $region101: #{tpu_custom_call.1} parent=75 // pred_check
          %p653 = pneg %p222
        $region102: #{tpu_custom_call.1} parent=75 // pred_check_branch
          %655 = sbr.rel (%p653) target = $region104
        $region103: #{tpu_custom_call.1} parent=75 // pred_region
          %656 = dma.done [#allocation12], 2048
        $region104: #{tpu_custom_call.1} parent=75 // pred_fallthru
          _
        // Predicated region
        $region105: #{tpu_custom_call.1} parent=75 // pred_check
          %p657 = pneg %p243
        $region106: #{tpu_custom_call.1} parent=75 // pred_check_branch
          %659 = sbr.rel (%p657) target = $region108
        $region107: #{tpu_custom_call.1} parent=75 // pred_region
          %660 = dma.done [#allocation15], 2048
        $region108: #{tpu_custom_call.1} parent=75 // pred_fallthru
          _
        %s661 = sand.u32 %s66, 1
        %s662 = scalar_lea.sflag [#allocation3], %s661
        %s663 = sand.u32 %s66, 1
        %s664 = smul.addr %s663, 16
        %s665 = scalar_lea.vmem [#allocation2], %s664
        %p666 = pneg %p79
        %p667 = pneg %p76
        %s668 = sand.u32 %s44, 1
        %s669 = scalar_lea.sflag [#allocation6], %s668
        %s670 = sand.u32 %s92, 1
        %s671 = smul.addr %s670, 128
        %s672 = scalar_lea.vmem [#allocation5], %s671
        %p673 = pneg %p105
        %p674 = pneg %p102
        %s675 = sand.u32 %s44, 1
        %s676 = scalar_lea.sflag [#allocation6], %s675
        %s677 = sand.u32 %s118, 1
        %s678 = smul.addr %s677, 128
        %s679 = scalar_lea.vmem [#allocation7], %s678
        %p680 = pneg %p131
        %p681 = pneg %p128
        %s682 = sand.u32 %s44, 1
        %s683 = scalar_lea.sflag [#allocation9], %s682
        %s684 = sand.u32 %s146, 1
        %s685 = smul.addr %s684, 16
        %s686 = scalar_lea.vmem [#allocation8], %s685
        %p687 = pneg %p159
        %p688 = pneg %p156
        %p689 = pneg %p180
        %p690 = pneg %p177
        %p691 = pneg %p201
        %p692 = pneg %p198
        %p693 = pneg %p222
        %p694 = pneg %p219
        %p695 = pneg %p243
        %p696 = pneg %p240
        %p697 = pneg %p264
        %p698 = pneg %p261
        %p699 = pneg %p285
        %p700 = pneg %p282
        %p701 = pneg %p306
        %p702 = pneg %p303
        %p703 = pneg %p327
        %p704 = pneg %p324
        %p705 = pneg %p348
        %p706 = pneg %p345
        %p707 = pneg %p369
        %p708 = pneg %p366
        %p709 = pneg %p397
        %p710 = pneg %p394
        %s711 = sand.u32 %s384, 1
        %s712 = scalar_lea.sflag [#allocation4], %s711
        %s713 = sand.u32 %s384, 1
        %s714 = smul.addr %s713, 16
        %s715 = scalar_lea.vmem [#allocation16], %s714
        %p716 = pneg %p425
        %p717 = pneg %p422
        %s718 = sand.u32 %s412, 1
        %s719 = scalar_lea.sflag [#allocation18], %s718
        %s720 = sand.u32 %s412, 1
        %s721 = smul.addr %s720, 16
        %s722 = scalar_lea.vmem [#allocation17], %s721
        %s723 = smul.u32 2, %s49
        %s724 = smul.u32 2, %s49
        %s725 = smul.u32 2, %s49
        %s726 = smul.u32 2, %s49
        %v727 = vld [vmem:[%s613] sm:$0xff]
        %v728 = vld [vmem:[%s613 + $0x8] sm:$0xff]
        %v729 = vld [vmem:[%s622] sm:$0xff]
        %v730 = vld [vmem:[%s622 + $0x8] sm:$0xff]
        %v731 = vld [vmem:[%s622 + $0x10] sm:$0xff]
        %v732 = vld [vmem:[%s622 + $0x18] sm:$0xff]
        %v733 = vld [vmem:[%s622 + $0x20] sm:$0xff]
        %v734 = vld [vmem:[%s622 + $0x28] sm:$0xff]
        %v735 = vld [vmem:[%s622 + $0x30] sm:$0xff]
        %v736 = vld [vmem:[%s622 + $0x38] sm:$0xff]
        %v737 = vld [vmem:[%s622 + $0x40] sm:$0xff]
        %v738 = vld [vmem:[%s622 + $0x48] sm:$0xff]
        %v739 = vld [vmem:[%s622 + $0x50] sm:$0xff]
        %v740 = vld [vmem:[%s622 + $0x58] sm:$0xff]
        %v741 = vld [vmem:[%s622 + $0x60] sm:$0xff]
        %v742 = vld [vmem:[%s622 + $0x68] sm:$0xff]
        %v743 = vld [vmem:[%s622 + $0x70] sm:$0xff]
        %v744 = vld [vmem:[%s622 + $0x78] sm:$0xff]
        %v745 = vld [vmem:[%s631] sm:$0xff]
        %v746 = vld [vmem:[%s631 + $0x8] sm:$0xff]
        %v747 = vld [vmem:[%s631 + $0x10] sm:$0xff]
        %v748 = vld [vmem:[%s631 + $0x18] sm:$0xff]
        %v749 = vld [vmem:[%s631 + $0x20] sm:$0xff]
        %v750 = vld [vmem:[%s631 + $0x28] sm:$0xff]
        %v751 = vld [vmem:[%s631 + $0x30] sm:$0xff]
        %v752 = vld [vmem:[%s631 + $0x38] sm:$0xff]
        %v753 = vld [vmem:[%s631 + $0x40] sm:$0xff]
        %v754 = vld [vmem:[%s631 + $0x48] sm:$0xff]
        %v755 = vld [vmem:[%s631 + $0x50] sm:$0xff]
        %v756 = vld [vmem:[%s631 + $0x58] sm:$0xff]
        %v757 = vld [vmem:[%s631 + $0x60] sm:$0xff]
        %v758 = vld [vmem:[%s631 + $0x68] sm:$0xff]
        %v759 = vld [vmem:[%s631 + $0x70] sm:$0xff]
        %v760 = vld [vmem:[%s631 + $0x78] sm:$0xff]
        %v761 = vld [vmem:[#allocation10] sm:$0xff]
        %v762 = vld [vmem:[#allocation10 + $0x8] sm:$0xff]
        %v763 = vld [vmem:[#allocation10 + $0x10] sm:$0xff]
        %v764 = vld [vmem:[#allocation10 + $0x18] sm:$0xff]
        %v765 = vld [vmem:[#allocation10 + $0x20] sm:$0xff]
        %v766 = vld [vmem:[#allocation10 + $0x28] sm:$0xff]
        %v767 = vld [vmem:[#allocation10 + $0x30] sm:$0xff]
        %v768 = vld [vmem:[#allocation10 + $0x38] sm:$0xff]
        %v769 = vld [vmem:[#allocation10 + $0x40] sm:$0xff]
        %v770 = vld [vmem:[#allocation10 + $0x48] sm:$0xff]
        %v771 = vld [vmem:[#allocation10 + $0x50] sm:$0xff]
        %v772 = vld [vmem:[#allocation10 + $0x58] sm:$0xff]
        %v773 = vld [vmem:[#allocation10 + $0x60] sm:$0xff]
        %v774 = vld [vmem:[#allocation10 + $0x68] sm:$0xff]
        %v775 = vld [vmem:[#allocation10 + $0x70] sm:$0xff]
        %v776 = vld [vmem:[#allocation10 + $0x78] sm:$0xff]
        %v777 = vld [vmem:[%s8] sm:$0x1]
        %v779 = vlaneseq
        %v780 = vshrl.u32 %v779, 7
        %v781 = vsub.s32 0, %v780
        %v782 = vrot.slane %v777, %v781
        %784 = vmatprep.subr.mxu0 0.0
        %785 = vmatpush1.msra.mxu0 %v776
        %786 = vmatprep.subr.mxu0 0.0
        %787 = vmatpush1.msra.mxu0 %v775
        %788 = vmatprep.subr.mxu0 0.0
        %789 = vmatpush1.msra.mxu0 %v774
        %790 = vmatprep.subr.mxu0 0.0
        %791 = vmatpush1.msra.mxu0 %v773
        %792 = vmatprep.subr.mxu0 0.0
        %793 = vmatpush1.msra.mxu0 %v772
        %794 = vmatprep.subr.mxu0 0.0
        %795 = vmatpush1.msra.mxu0 %v771
        %796 = vmatprep.subr.mxu0 0.0
        %797 = vmatpush1.msra.mxu0 %v770
        %798 = vmatprep.subr.mxu0 0.0
        %799 = vmatpush1.msra.mxu0 %v769
        %800 = vmatprep.subr.mxu0 0.0
        %801 = vmatpush1.msra.mxu0 %v768
        %802 = vmatprep.subr.mxu0 0.0
        %803 = vmatpush1.msra.mxu0 %v767
        %804 = vmatprep.subr.mxu0 0.0
        %805 = vmatpush1.msra.mxu0 %v766
        %806 = vmatprep.subr.mxu0 0.0
        %807 = vmatpush1.msra.mxu0 %v765
        %808 = vmatprep.subr.mxu0 0.0
        %809 = vmatpush1.msra.mxu0 %v764
        %810 = vmatprep.subr.mxu0 0.0
        %811 = vmatpush1.msra.mxu0 %v763
        %812 = vmatprep.subr.mxu0 0.0
        %813 = vmatpush1.msra.mxu0 %v762
        %814 = vmatprep.subr.mxu0 0.0
        %815 = vmatpush1.msra.mxu0 %v761
        %816 = vmatprep.subr.mxu0 0.0
        %817 = vmatpush2.msra.mxu0 0.0
        %818 = vmatprep.subr.mxu0 0.0
        %819 = vmatpush2.msra.mxu0 0.0
        %820 = vmatprep.subr.mxu0 0.0
        %821 = vmatpush2.msra.mxu0 0.0
        %822 = vmatprep.subr.mxu0 0.0
        %823 = vmatpush2.msra.mxu0 0.0
        %824 = vmatprep.subr.mxu0 0.0
        %825 = vmatpush2.msra.mxu0 0.0
        %826 = vmatprep.subr.mxu0 0.0
        %827 = vmatpush2.msra.mxu0 0.0
        %828 = vmatprep.subr.mxu0 0.0
        %829 = vmatpush2.msra.mxu0 0.0
        %830 = vmatprep.subr.mxu0 0.0
        %831 = vmatpush2.msra.mxu0 0.0
        %832 = vmatprep.subr.mxu0 0.0
        %833 = vmatpush2.msra.mxu0 0.0
        %834 = vmatprep.subr.mxu0 0.0
        %835 = vmatpush2.msra.mxu0 0.0
        %836 = vmatprep.subr.mxu0 0.0
        %837 = vmatpush2.msra.mxu0 0.0
        %838 = vmatprep.subr.mxu0 0.0
        %839 = vmatpush2.msra.mxu0 0.0
        %840 = vmatprep.subr.mxu0 0.0
        %841 = vmatpush2.msra.mxu0 0.0
        %842 = vmatprep.subr.mxu0 0.0
        %843 = vmatpush2.msra.mxu0 0.0
        %844 = vmatprep.subr.mxu0 0.0
        %845 = vmatpush2.msra.mxu0 0.0
        %846 = vmatprep.subr.mxu0 0.0
        %847 = vmatpush2.msra.mxu0 0.0
        %848 = vmatprep.mubr.f32.mxu0 0.0
        %849 = vmatmul.mubr.f32.gmra.mxu0 %v727
        %v850 = vpop.f32.mrf.mxu0
        %v851 = vadd.f32 %v782, %v850
        %v852 = vpop.f32.mrf.mxu0
        %853 = vmatprep.mubr.f32.mxu0 0.0
        %854 = vmatmul.mubr.f32.gmra.mxu0 %v728
        %v855 = vpop.f32.mrf.mxu0
        %v856 = vadd.f32 %v782, %v855
        %v857 = vpop.f32.mrf.mxu0
        %858 = vdwg.mxu0
        %v859 = vld [vmem:[#allocation11] sm:$0xff]
        %v860 = vld [vmem:[#allocation11 + $0x8] sm:$0xff]
        %v861 = vld [vmem:[#allocation11 + $0x10] sm:$0xff]
        %v862 = vld [vmem:[#allocation11 + $0x18] sm:$0xff]
        %v863 = vld [vmem:[#allocation11 + $0x20] sm:$0xff]
        %v864 = vld [vmem:[#allocation11 + $0x28] sm:$0xff]
        %v865 = vld [vmem:[#allocation11 + $0x30] sm:$0xff]
        %v866 = vld [vmem:[#allocation11 + $0x38] sm:$0xff]
        %v867 = vld [vmem:[#allocation11 + $0x40] sm:$0xff]
        %v868 = vld [vmem:[#allocation11 + $0x48] sm:$0xff]
        %v869 = vld [vmem:[#allocation11 + $0x50] sm:$0xff]
        %v870 = vld [vmem:[#allocation11 + $0x58] sm:$0xff]
        %v871 = vld [vmem:[#allocation11 + $0x60] sm:$0xff]
        %v872 = vld [vmem:[#allocation11 + $0x68] sm:$0xff]
        %v873 = vld [vmem:[#allocation11 + $0x70] sm:$0xff]
        %v874 = vld [vmem:[#allocation11 + $0x78] sm:$0xff]
        %v875 = vld [vmem:[%s9] sm:$0x1]
        %v877 = vlaneseq
        %v878 = vshrl.u32 %v877, 7
        %v879 = vsub.s32 0, %v878
        %v880 = vrot.slane %v875, %v879
        %882 = vmatprep.subr.mxu0 0.0
        %883 = vmatpush1.msra.mxu0 %v874
        %884 = vmatprep.subr.mxu0 0.0
        %885 = vmatpush1.msra.mxu0 %v873
        %886 = vmatprep.subr.mxu0 0.0
        %887 = vmatpush1.msra.mxu0 %v872
        %888 = vmatprep.subr.mxu0 0.0
        %889 = vmatpush1.msra.mxu0 %v871
        %890 = vmatprep.subr.mxu0 0.0
        %891 = vmatpush1.msra.mxu0 %v870
        %892 = vmatprep.subr.mxu0 0.0
        %893 = vmatpush1.msra.mxu0 %v869
        %894 = vmatprep.subr.mxu0 0.0
        %895 = vmatpush1.msra.mxu0 %v868
        %896 = vmatprep.subr.mxu0 0.0
        %897 = vmatpush1.msra.mxu0 %v867
        %898 = vmatprep.subr.mxu0 0.0
        %899 = vmatpush1.msra.mxu0 %v866
        %900 = vmatprep.subr.mxu0 0.0
        %901 = vmatpush1.msra.mxu0 %v865
        %902 = vmatprep.subr.mxu0 0.0
        %903 = vmatpush1.msra.mxu0 %v864
        %904 = vmatprep.subr.mxu0 0.0
        %905 = vmatpush1.msra.mxu0 %v863
        %906 = vmatprep.subr.mxu0 0.0
        %907 = vmatpush1.msra.mxu0 %v862
        %908 = vmatprep.subr.mxu0 0.0
        %909 = vmatpush1.msra.mxu0 %v861
        %910 = vmatprep.subr.mxu0 0.0
        %911 = vmatpush1.msra.mxu0 %v860
        %912 = vmatprep.subr.mxu0 0.0
        %913 = vmatpush1.msra.mxu0 %v859
        %914 = vmatprep.subr.mxu0 0.0
        %915 = vmatpush2.msra.mxu0 0.0
        %916 = vmatprep.subr.mxu0 0.0
        %917 = vmatpush2.msra.mxu0 0.0
        %918 = vmatprep.subr.mxu0 0.0
        %919 = vmatpush2.msra.mxu0 0.0
        %920 = vmatprep.subr.mxu0 0.0
        %921 = vmatpush2.msra.mxu0 0.0
        %922 = vmatprep.subr.mxu0 0.0
        %923 = vmatpush2.msra.mxu0 0.0
        %924 = vmatprep.subr.mxu0 0.0
        %925 = vmatpush2.msra.mxu0 0.0
        %926 = vmatprep.subr.mxu0 0.0
        %927 = vmatpush2.msra.mxu0 0.0
        %928 = vmatprep.subr.mxu0 0.0
        %929 = vmatpush2.msra.mxu0 0.0
        %930 = vmatprep.subr.mxu0 0.0
        %931 = vmatpush2.msra.mxu0 0.0
        %932 = vmatprep.subr.mxu0 0.0
        %933 = vmatpush2.msra.mxu0 0.0
        %934 = vmatprep.subr.mxu0 0.0
        %935 = vmatpush2.msra.mxu0 0.0
        %936 = vmatprep.subr.mxu0 0.0
        %937 = vmatpush2.msra.mxu0 0.0
        %938 = vmatprep.subr.mxu0 0.0
        %939 = vmatpush2.msra.mxu0 0.0
        %940 = vmatprep.subr.mxu0 0.0
        %941 = vmatpush2.msra.mxu0 0.0
        %942 = vmatprep.subr.mxu0 0.0
        %943 = vmatpush2.msra.mxu0 0.0
        %944 = vmatprep.subr.mxu0 0.0
        %945 = vmatpush2.msra.mxu0 0.0
        %946 = vmatprep.mubr.f32.mxu0 0.0
        %947 = vmatmul.mubr.f32.gmra.mxu0 %v729
        %v948 = vpop.f32.mrf.mxu0
        %v949 = vadd.f32 %v880, %v948
        %v950 = vpop.f32.mrf.mxu0
        %951 = vmatprep.mubr.f32.mxu0 0.0
        %952 = vmatmul.mubr.f32.gmra.mxu0 %v730
        %v953 = vpop.f32.mrf.mxu0
        %v954 = vadd.f32 %v880, %v953
        %v955 = vpop.f32.mrf.mxu0
        %956 = vmatprep.mubr.f32.mxu0 0.0
        %957 = vmatmul.mubr.f32.gmra.mxu0 %v731
        %v958 = vpop.f32.mrf.mxu0
        %v959 = vadd.f32 %v880, %v958
        %v960 = vpop.f32.mrf.mxu0
        %961 = vmatprep.mubr.f32.mxu0 0.0
        %962 = vmatmul.mubr.f32.gmra.mxu0 %v732
        %v963 = vpop.f32.mrf.mxu0
        %v964 = vadd.f32 %v880, %v963
        %v965 = vpop.f32.mrf.mxu0
        %966 = vmatprep.mubr.f32.mxu0 0.0
        %967 = vmatmul.mubr.f32.gmra.mxu0 %v733
        %v968 = vpop.f32.mrf.mxu0
        %v969 = vadd.f32 %v880, %v968
        %v970 = vpop.f32.mrf.mxu0
        %971 = vmatprep.mubr.f32.mxu0 0.0
        %972 = vmatmul.mubr.f32.gmra.mxu0 %v734
        %v973 = vpop.f32.mrf.mxu0
        %v974 = vadd.f32 %v880, %v973
        %v975 = vpop.f32.mrf.mxu0
        %976 = vmatprep.mubr.f32.mxu0 0.0
        %977 = vmatmul.mubr.f32.gmra.mxu0 %v735
        %v978 = vpop.f32.mrf.mxu0
        %v979 = vadd.f32 %v880, %v978
        %v980 = vpop.f32.mrf.mxu0
        %981 = vmatprep.mubr.f32.mxu0 0.0
        %982 = vmatmul.mubr.f32.gmra.mxu0 %v736
        %v983 = vpop.f32.mrf.mxu0
        %v984 = vadd.f32 %v880, %v983
        %v985 = vpop.f32.mrf.mxu0
        %986 = vmatprep.mubr.f32.mxu0 0.0
        %987 = vmatmul.mubr.f32.gmra.mxu0 %v737
        %v988 = vpop.f32.mrf.mxu0
        %v989 = vadd.f32 %v880, %v988
        %v990 = vpop.f32.mrf.mxu0
        %991 = vmatprep.mubr.f32.mxu0 0.0
        %992 = vmatmul.mubr.f32.gmra.mxu0 %v738
        %v993 = vpop.f32.mrf.mxu0
        %v994 = vadd.f32 %v880, %v993
        %v995 = vpop.f32.mrf.mxu0
        %996 = vmatprep.mubr.f32.mxu0 0.0
        %997 = vmatmul.mubr.f32.gmra.mxu0 %v739
        %v998 = vpop.f32.mrf.mxu0
        %v999 = vadd.f32 %v880, %v998
        %v1000 = vpop.f32.mrf.mxu0
        %1001 = vmatprep.mubr.f32.mxu0 0.0
        %1002 = vmatmul.mubr.f32.gmra.mxu0 %v740
        %v1003 = vpop.f32.mrf.mxu0
        %v1004 = vadd.f32 %v880, %v1003
        %v1005 = vpop.f32.mrf.mxu0
        %1006 = vmatprep.mubr.f32.mxu0 0.0
        %1007 = vmatmul.mubr.f32.gmra.mxu0 %v741
        %v1008 = vpop.f32.mrf.mxu0
        %v1009 = vadd.f32 %v880, %v1008
        %v1010 = vpop.f32.mrf.mxu0
        %1011 = vmatprep.mubr.f32.mxu0 0.0
        %1012 = vmatmul.mubr.f32.gmra.mxu0 %v742
        %v1013 = vpop.f32.mrf.mxu0
        %v1014 = vadd.f32 %v880, %v1013
        %v1015 = vpop.f32.mrf.mxu0
        %1016 = vmatprep.mubr.f32.mxu0 0.0
        %1017 = vmatmul.mubr.f32.gmra.mxu0 %v743
        %v1018 = vpop.f32.mrf.mxu0
        %v1019 = vadd.f32 %v880, %v1018
        %v1020 = vpop.f32.mrf.mxu0
        %1021 = vmatprep.mubr.f32.mxu0 0.0
        %1022 = vmatmul.mubr.f32.gmra.mxu0 %v744
        %v1023 = vpop.f32.mrf.mxu0
        %v1024 = vadd.f32 %v880, %v1023
        %v1025 = vpop.f32.mrf.mxu0
        %1026 = vdwg.mxu0
        %v1027 = vld [vmem:[#allocation13] sm:$0xff]
        %v1028 = vld [vmem:[#allocation13 + $0x8] sm:$0xff]
        %v1029 = vld [vmem:[#allocation13 + $0x10] sm:$0xff]
        %v1030 = vld [vmem:[#allocation13 + $0x18] sm:$0xff]
        %v1031 = vld [vmem:[#allocation13 + $0x20] sm:$0xff]
        %v1032 = vld [vmem:[#allocation13 + $0x28] sm:$0xff]
        %v1033 = vld [vmem:[#allocation13 + $0x30] sm:$0xff]
        %v1034 = vld [vmem:[#allocation13 + $0x38] sm:$0xff]
        %v1035 = vld [vmem:[#allocation13 + $0x40] sm:$0xff]
        %v1036 = vld [vmem:[#allocation13 + $0x48] sm:$0xff]
        %v1037 = vld [vmem:[#allocation13 + $0x50] sm:$0xff]
        %v1038 = vld [vmem:[#allocation13 + $0x58] sm:$0xff]
        %v1039 = vld [vmem:[#allocation13 + $0x60] sm:$0xff]
        %v1040 = vld [vmem:[#allocation13 + $0x68] sm:$0xff]
        %v1041 = vld [vmem:[#allocation13 + $0x70] sm:$0xff]
        %v1042 = vld [vmem:[#allocation13 + $0x78] sm:$0xff]
        %v1043 = vld [vmem:[%s10] sm:$0x1]
        %v1045 = vlaneseq
        %v1046 = vshrl.u32 %v1045, 7
        %v1047 = vsub.s32 0, %v1046
        %v1048 = vrot.slane %v1043, %v1047
        %1050 = vmatprep.subr.mxu0 0.0
        %1051 = vmatpush1.msra.mxu0 %v1042
        %1052 = vmatprep.subr.mxu0 0.0
        %1053 = vmatpush1.msra.mxu0 %v1041
        %1054 = vmatprep.subr.mxu0 0.0
        %1055 = vmatpush1.msra.mxu0 %v1040
        %1056 = vmatprep.subr.mxu0 0.0
        %1057 = vmatpush1.msra.mxu0 %v1039
        %1058 = vmatprep.subr.mxu0 0.0
        %1059 = vmatpush1.msra.mxu0 %v1038
        %1060 = vmatprep.subr.mxu0 0.0
        %1061 = vmatpush1.msra.mxu0 %v1037
        %1062 = vmatprep.subr.mxu0 0.0
        %1063 = vmatpush1.msra.mxu0 %v1036
        %1064 = vmatprep.subr.mxu0 0.0
        %1065 = vmatpush1.msra.mxu0 %v1035
        %1066 = vmatprep.subr.mxu0 0.0
        %1067 = vmatpush1.msra.mxu0 %v1034
        %1068 = vmatprep.subr.mxu0 0.0
        %1069 = vmatpush1.msra.mxu0 %v1033
        %1070 = vmatprep.subr.mxu0 0.0
        %1071 = vmatpush1.msra.mxu0 %v1032
        %1072 = vmatprep.subr.mxu0 0.0
        %1073 = vmatpush1.msra.mxu0 %v1031
        %1074 = vmatprep.subr.mxu0 0.0
        %1075 = vmatpush1.msra.mxu0 %v1030
        %1076 = vmatprep.subr.mxu0 0.0
        %1077 = vmatpush1.msra.mxu0 %v1029
        %1078 = vmatprep.subr.mxu0 0.0
        %1079 = vmatpush1.msra.mxu0 %v1028
        %1080 = vmatprep.subr.mxu0 0.0
        %1081 = vmatpush1.msra.mxu0 %v1027
        %1082 = vmatprep.subr.mxu0 0.0
        %1083 = vmatpush2.msra.mxu0 0.0
        %1084 = vmatprep.subr.mxu0 0.0
        %1085 = vmatpush2.msra.mxu0 0.0
        %1086 = vmatprep.subr.mxu0 0.0
        %1087 = vmatpush2.msra.mxu0 0.0
        %1088 = vmatprep.subr.mxu0 0.0
        %1089 = vmatpush2.msra.mxu0 0.0
        %1090 = vmatprep.subr.mxu0 0.0
        %1091 = vmatpush2.msra.mxu0 0.0
        %1092 = vmatprep.subr.mxu0 0.0
        %1093 = vmatpush2.msra.mxu0 0.0
        %1094 = vmatprep.subr.mxu0 0.0
        %1095 = vmatpush2.msra.mxu0 0.0
        %1096 = vmatprep.subr.mxu0 0.0
        %1097 = vmatpush2.msra.mxu0 0.0
        %1098 = vmatprep.subr.mxu0 0.0
        %1099 = vmatpush2.msra.mxu0 0.0
        %1100 = vmatprep.subr.mxu0 0.0
        %1101 = vmatpush2.msra.mxu0 0.0
        %1102 = vmatprep.subr.mxu0 0.0
        %1103 = vmatpush2.msra.mxu0 0.0
        %1104 = vmatprep.subr.mxu0 0.0
        %1105 = vmatpush2.msra.mxu0 0.0
        %1106 = vmatprep.subr.mxu0 0.0
        %1107 = vmatpush2.msra.mxu0 0.0
        %1108 = vmatprep.subr.mxu0 0.0
        %1109 = vmatpush2.msra.mxu0 0.0
        %1110 = vmatprep.subr.mxu0 0.0
        %1111 = vmatpush2.msra.mxu0 0.0
        %1112 = vmatprep.subr.mxu0 0.0
        %1113 = vmatpush2.msra.mxu0 0.0
        %1114 = vmatprep.mubr.f32.mxu0 0.0
        %1115 = vmatmul.mubr.f32.gmra.mxu0 %v745
        %v1116 = vpop.f32.mrf.mxu0
        %v1117 = vadd.f32 %v1048, %v1116
        %v1118 = vpop.f32.mrf.mxu0
        %1119 = vmatprep.mubr.f32.mxu0 0.0
        %1120 = vmatmul.mubr.f32.gmra.mxu0 %v746
        %v1121 = vpop.f32.mrf.mxu0
        %v1122 = vadd.f32 %v1048, %v1121
        %v1123 = vpop.f32.mrf.mxu0
        %1124 = vmatprep.mubr.f32.mxu0 0.0
        %1125 = vmatmul.mubr.f32.gmra.mxu0 %v747
        %v1126 = vpop.f32.mrf.mxu0
        %v1127 = vadd.f32 %v1048, %v1126
        %v1128 = vpop.f32.mrf.mxu0
        %1129 = vmatprep.mubr.f32.mxu0 0.0
        %1130 = vmatmul.mubr.f32.gmra.mxu0 %v748
        %v1131 = vpop.f32.mrf.mxu0
        %v1132 = vadd.f32 %v1048, %v1131
        %v1133 = vpop.f32.mrf.mxu0
        %1134 = vmatprep.mubr.f32.mxu0 0.0
        %1135 = vmatmul.mubr.f32.gmra.mxu0 %v749
        %v1136 = vpop.f32.mrf.mxu0
        %v1137 = vadd.f32 %v1048, %v1136
        %v1138 = vpop.f32.mrf.mxu0
        %1139 = vmatprep.mubr.f32.mxu0 0.0
        %1140 = vmatmul.mubr.f32.gmra.mxu0 %v750
        %v1141 = vpop.f32.mrf.mxu0
        %v1142 = vadd.f32 %v1048, %v1141
        %v1143 = vpop.f32.mrf.mxu0
        %1144 = vmatprep.mubr.f32.mxu0 0.0
        %1145 = vmatmul.mubr.f32.gmra.mxu0 %v751
        %v1146 = vpop.f32.mrf.mxu0
        %v1147 = vadd.f32 %v1048, %v1146
        %v1148 = vpop.f32.mrf.mxu0
        %1149 = vmatprep.mubr.f32.mxu0 0.0
        %1150 = vmatmul.mubr.f32.gmra.mxu0 %v752
        %v1151 = vpop.f32.mrf.mxu0
        %v1152 = vadd.f32 %v1048, %v1151
        %v1153 = vpop.f32.mrf.mxu0
        %1154 = vmatprep.mubr.f32.mxu0 0.0
        %1155 = vmatmul.mubr.f32.gmra.mxu0 %v753
        %v1156 = vpop.f32.mrf.mxu0
        %v1157 = vadd.f32 %v1048, %v1156
        %v1158 = vpop.f32.mrf.mxu0
        %1159 = vmatprep.mubr.f32.mxu0 0.0
        %1160 = vmatmul.mubr.f32.gmra.mxu0 %v754
        %v1161 = vpop.f32.mrf.mxu0
        %v1162 = vadd.f32 %v1048, %v1161
        %v1163 = vpop.f32.mrf.mxu0
        %1164 = vmatprep.mubr.f32.mxu0 0.0
        %1165 = vmatmul.mubr.f32.gmra.mxu0 %v755
        %v1166 = vpop.f32.mrf.mxu0
        %v1167 = vadd.f32 %v1048, %v1166
        %v1168 = vpop.f32.mrf.mxu0
        %1169 = vmatprep.mubr.f32.mxu0 0.0
        %1170 = vmatmul.mubr.f32.gmra.mxu0 %v756
        %v1171 = vpop.f32.mrf.mxu0
        %v1172 = vadd.f32 %v1048, %v1171
        %v1173 = vpop.f32.mrf.mxu0
        %1174 = vmatprep.mubr.f32.mxu0 0.0
        %1175 = vmatmul.mubr.f32.gmra.mxu0 %v757
        %v1176 = vpop.f32.mrf.mxu0
        %v1177 = vadd.f32 %v1048, %v1176
        %v1178 = vpop.f32.mrf.mxu0
        %1179 = vmatprep.mubr.f32.mxu0 0.0
        %1180 = vmatmul.mubr.f32.gmra.mxu0 %v758
        %v1181 = vpop.f32.mrf.mxu0
        %v1182 = vadd.f32 %v1048, %v1181
        %v1183 = vpop.f32.mrf.mxu0
        %1184 = vmatprep.mubr.f32.mxu0 0.0
        %1185 = vmatmul.mubr.f32.gmra.mxu0 %v759
        %v1186 = vpop.f32.mrf.mxu0
        %v1187 = vadd.f32 %v1048, %v1186
        %v1188 = vpop.f32.mrf.mxu0
        %1189 = vmatprep.mubr.f32.mxu0 0.0
        %1190 = vmatmul.mubr.f32.gmra.mxu0 %v760
        %v1191 = vpop.f32.mrf.mxu0
        %v1192 = vadd.f32 %v1048, %v1191
        %v1193 = vpop.f32.mrf.mxu0
        %1194 = vdwg.mxu0
        %v1195 = vmul.f32 %v851, 0.17677669
        %v1196 = vmul.f32 %v856, 0.17677669
        %vm1197 = vcmask 261120
        %v1199 = vsel %vm1197, %v1195, 0
        %v1202 = vsel %vm1197, %v1196, 0
        %v1205 = vsel %vm1197, %v949, 0
        %v1208 = vsel %vm1197, %v954, 0
        %v1211 = vsel %vm1197, %v959, 0
        %v1214 = vsel %vm1197, %v964, 0
        %v1217 = vsel %vm1197, %v969, 0
        %v1220 = vsel %vm1197, %v974, 0
        %v1223 = vsel %vm1197, %v979, 0
        %v1226 = vsel %vm1197, %v984, 0
        %v1229 = vsel %vm1197, %v989, 0
        %v1232 = vsel %vm1197, %v994, 0
        %v1235 = vsel %vm1197, %v999, 0
        %v1238 = vsel %vm1197, %v1004, 0
        %v1241 = vsel %vm1197, %v1009, 0
        %v1244 = vsel %vm1197, %v1014, 0
        %v1247 = vsel %vm1197, %v1019, 0
        %v1250 = vsel %vm1197, %v1024, 0
        %1252 = vmatprep.subr.mxu0 0.0
        %1253 = vmatpush1.xpose.msra.mxu0 %v1250
        %1254 = vmatprep.subr.mxu0 0.0
        %1255 = vmatpush1.xpose.msra.mxu0 %v1247
        %1256 = vmatprep.subr.mxu0 0.0
        %1257 = vmatpush1.xpose.msra.mxu0 %v1244
        %1258 = vmatprep.subr.mxu0 0.0
        %1259 = vmatpush1.xpose.msra.mxu0 %v1241
        %1260 = vmatprep.subr.mxu0 0.0
        %1261 = vmatpush1.xpose.msra.mxu0 %v1238
        %1262 = vmatprep.subr.mxu0 0.0
        %1263 = vmatpush1.xpose.msra.mxu0 %v1235
        %1264 = vmatprep.subr.mxu0 0.0
        %1265 = vmatpush1.xpose.msra.mxu0 %v1232
        %1266 = vmatprep.subr.mxu0 0.0
        %1267 = vmatpush1.xpose.msra.mxu0 %v1229
        %1268 = vmatprep.subr.mxu0 0.0
        %1269 = vmatpush1.xpose.msra.mxu0 %v1226
        %1270 = vmatprep.subr.mxu0 0.0
        %1271 = vmatpush1.xpose.msra.mxu0 %v1223
        %1272 = vmatprep.subr.mxu0 0.0
        %1273 = vmatpush1.xpose.msra.mxu0 %v1220
        %1274 = vmatprep.subr.mxu0 0.0
        %1275 = vmatpush1.xpose.msra.mxu0 %v1217
        %1276 = vmatprep.subr.mxu0 0.0
        %1277 = vmatpush1.xpose.msra.mxu0 %v1214
        %1278 = vmatprep.subr.mxu0 0.0
        %1279 = vmatpush1.xpose.msra.mxu0 %v1211
        %1280 = vmatprep.subr.mxu0 0.0
        %1281 = vmatpush1.xpose.msra.mxu0 %v1208
        %1282 = vmatprep.subr.mxu0 0.0
        %1283 = vmatpush1.xpose.msra.mxu0 %v1205
        %1284 = vmatprep.subr.mxu0 0.0
        %1285 = vmatpush2.xpose.msra.mxu0 0.0
        %1286 = vmatprep.subr.mxu0 0.0
        %1287 = vmatpush2.xpose.msra.mxu0 0.0
        %1288 = vmatprep.subr.mxu0 0.0
        %1289 = vmatpush2.xpose.msra.mxu0 0.0
        %1290 = vmatprep.subr.mxu0 0.0
        %1291 = vmatpush2.xpose.msra.mxu0 0.0
        %1292 = vmatprep.subr.mxu0 0.0
        %1293 = vmatpush2.xpose.msra.mxu0 0.0
        %1294 = vmatprep.subr.mxu0 0.0
        %1295 = vmatpush2.xpose.msra.mxu0 0.0
        %1296 = vmatprep.subr.mxu0 0.0
        %1297 = vmatpush2.xpose.msra.mxu0 0.0
        %1298 = vmatprep.subr.mxu0 0.0
        %1299 = vmatpush2.xpose.msra.mxu0 0.0
        %1300 = vmatprep.subr.mxu0 0.0
        %1301 = vmatpush2.xpose.msra.mxu0 0.0
        %1302 = vmatprep.subr.mxu0 0.0
        %1303 = vmatpush2.xpose.msra.mxu0 0.0
        %1304 = vmatprep.subr.mxu0 0.0
        %1305 = vmatpush2.xpose.msra.mxu0 0.0
        %1306 = vmatprep.subr.mxu0 0.0
        %1307 = vmatpush2.xpose.msra.mxu0 0.0
        %1308 = vmatprep.subr.mxu0 0.0
        %1309 = vmatpush2.xpose.msra.mxu0 0.0
        %1310 = vmatprep.subr.mxu0 0.0
        %1311 = vmatpush2.xpose.msra.mxu0 0.0
        %1312 = vmatprep.subr.mxu0 0.0
        %1313 = vmatpush2.xpose.msra.mxu0 0.0
        %1314 = vmatprep.subr.mxu0 0.0
        %1315 = vmatpush2.xpose.msra.mxu0 0.0
        %1316 = vmatprep.mubr.f32.mxu0 0.0
        %1317 = vmatmul.mubr.f32.gmra.mxu0 %v1199
        %v1318 = vpop.f32.mrf.mxu0
        %v1319 = vadd.f32 0.0, %v1318
        %v1320 = vpop.f32.mrf.mxu0
        %1321 = vmatprep.mubr.f32.mxu0 0.0
        %1322 = vmatmul.mubr.f32.gmra.mxu0 %v1202
        %v1323 = vpop.f32.mrf.mxu0
        %v1324 = vadd.f32 0.0, %v1323
        %v1325 = vpop.f32.mrf.mxu0
        %1326 = vdwg.mxu0
        %1327 = vmax.xlane.f32.xlu0 %v1319
        %v1328 = vpop.xlane.xlu0 %1327
        %1329 = vmax.xlane.f32.xlu0 %v1324
        %v1330 = vpop.xlane.xlu0 %1329
        %v1331 = vsub.f32 %v1319, %v1328
        %v1332 = vsub.f32 %v1324, %v1330
        %v1333 = vmul.f32 %v1331, 1.442695
        %v1334 = vpow.pop %v1333
        %v1335 = vmul.f32 %v1332, 1.442695
        %v1336 = vpow.pop %v1335
        %1337 = vadd.xlane.f32.xlu0 %v1334
        %v1338 = vpop.xlane.xlu0 %1337
        %1339 = vadd.xlane.f32.xlu0 %v1336
        %v1340 = vpop.xlane.xlu0 %1339
        %v1341 = vrcp.pop %v1338
        %v1342 = vmul.f32 %v1334, %v1341
        %v1343 = vrcp.pop %v1340
        %v1344 = vmul.f32 %v1336, %v1343
        %v1345 = vadd.f32 %v1342, 0.0
        %v1346 = vadd.f32 %v1344, 0.0
        %1347 = vmatprep.subr.mxu0 0.0
        %1348 = vmatpush1.msra.mxu0 %v1192
        %1349 = vmatprep.subr.mxu0 0.0
        %1350 = vmatpush1.msra.mxu0 %v1187
        %1351 = vmatprep.subr.mxu0 0.0
        %1352 = vmatpush1.msra.mxu0 %v1182
        %1353 = vmatprep.subr.mxu0 0.0
        %1354 = vmatpush1.msra.mxu0 %v1177
        %1355 = vmatprep.subr.mxu0 0.0
        %1356 = vmatpush1.msra.mxu0 %v1172
        %1357 = vmatprep.subr.mxu0 0.0
        %1358 = vmatpush1.msra.mxu0 %v1167
        %1359 = vmatprep.subr.mxu0 0.0
        %1360 = vmatpush1.msra.mxu0 %v1162
        %1361 = vmatprep.subr.mxu0 0.0
        %1362 = vmatpush1.msra.mxu0 %v1157
        %1363 = vmatprep.subr.mxu0 0.0
        %1364 = vmatpush1.msra.mxu0 %v1152
        %1365 = vmatprep.subr.mxu0 0.0
        %1366 = vmatpush1.msra.mxu0 %v1147
        %1367 = vmatprep.subr.mxu0 0.0
        %1368 = vmatpush1.msra.mxu0 %v1142
        %1369 = vmatprep.subr.mxu0 0.0
        %1370 = vmatpush1.msra.mxu0 %v1137
        %1371 = vmatprep.subr.mxu0 0.0
        %1372 = vmatpush1.msra.mxu0 %v1132
        %1373 = vmatprep.subr.mxu0 0.0
        %1374 = vmatpush1.msra.mxu0 %v1127
        %1375 = vmatprep.subr.mxu0 0.0
        %1376 = vmatpush1.msra.mxu0 %v1122
        %1377 = vmatprep.subr.mxu0 0.0
        %1378 = vmatpush1.msra.mxu0 %v1117
        %1379 = vmatprep.subr.mxu0 0.0
        %1380 = vmatpush2.msra.mxu0 0.0
        %1381 = vmatprep.subr.mxu0 0.0
        %1382 = vmatpush2.msra.mxu0 0.0
        %1383 = vmatprep.subr.mxu0 0.0
        %1384 = vmatpush2.msra.mxu0 0.0
        %1385 = vmatprep.subr.mxu0 0.0
        %1386 = vmatpush2.msra.mxu0 0.0
        %1387 = vmatprep.subr.mxu0 0.0
        %1388 = vmatpush2.msra.mxu0 0.0
        %1389 = vmatprep.subr.mxu0 0.0
        %1390 = vmatpush2.msra.mxu0 0.0
        %1391 = vmatprep.subr.mxu0 0.0
        %1392 = vmatpush2.msra.mxu0 0.0
        %1393 = vmatprep.subr.mxu0 0.0
        %1394 = vmatpush2.msra.mxu0 0.0
        %1395 = vmatprep.subr.mxu0 0.0
        %1396 = vmatpush2.msra.mxu0 0.0
        %1397 = vmatprep.subr.mxu0 0.0
        %1398 = vmatpush2.msra.mxu0 0.0
        %1399 = vmatprep.subr.mxu0 0.0
        %1400 = vmatpush2.msra.mxu0 0.0
        %1401 = vmatprep.subr.mxu0 0.0
        %1402 = vmatpush2.msra.mxu0 0.0
        %1403 = vmatprep.subr.mxu0 0.0
        %1404 = vmatpush2.msra.mxu0 0.0
        %1405 = vmatprep.subr.mxu0 0.0
        %1406 = vmatpush2.msra.mxu0 0.0
        %1407 = vmatprep.subr.mxu0 0.0
        %1408 = vmatpush2.msra.mxu0 0.0
        %1409 = vmatprep.subr.mxu0 0.0
        %1410 = vmatpush2.msra.mxu0 0.0
        %1411 = vmatprep.mubr.f32.mxu0 0.0
        %1412 = vmatmul.mubr.f32.gmra.mxu0 %v1342
        %v1413 = vpop.f32.mrf.mxu0
        %v1414 = vadd.f32 0.0, %v1413
        %v1415 = vpop.f32.mrf.mxu0
        %1416 = vmatprep.mubr.f32.mxu0 0.0
        %1417 = vmatmul.mubr.f32.gmra.mxu0 %v1344
        %v1418 = vpop.f32.mrf.mxu0
        %v1419 = vadd.f32 0.0, %v1418
        %v1420 = vpop.f32.mrf.mxu0
        %1421 = vdwg.mxu0
        %1422 = vrot.lane.b32.xlu0 %v1195, 96
        %v1423 = vpop.permute.xlu0 %1422
        %1424 = vrot.lane.b32.xlu0 %v1196, 96
        %v1425 = vpop.permute.xlu0 %1424
        %1426 = vrot.lane.b32.xlu0 %v949, 96
        %v1427 = vpop.permute.xlu0 %1426
        %1428 = vrot.lane.b32.xlu0 %v954, 96
        %v1429 = vpop.permute.xlu0 %1428
        %1430 = vrot.lane.b32.xlu0 %v959, 96
        %v1431 = vpop.permute.xlu0 %1430
        %1432 = vrot.lane.b32.xlu0 %v964, 96
        %v1433 = vpop.permute.xlu0 %1432
        %1434 = vrot.lane.b32.xlu0 %v969, 96
        %v1435 = vpop.permute.xlu0 %1434
        %1436 = vrot.lane.b32.xlu0 %v974, 96
        %v1437 = vpop.permute.xlu0 %1436
        %1438 = vrot.lane.b32.xlu0 %v979, 96
        %v1439 = vpop.permute.xlu0 %1438
        %1440 = vrot.lane.b32.xlu0 %v984, 96
        %v1441 = vpop.permute.xlu0 %1440
        %1442 = vrot.lane.b32.xlu0 %v989, 96
        %v1443 = vpop.permute.xlu0 %1442
        %1444 = vrot.lane.b32.xlu0 %v994, 96
        %v1445 = vpop.permute.xlu0 %1444
        %1446 = vrot.lane.b32.xlu0 %v999, 96
        %v1447 = vpop.permute.xlu0 %1446
        %1448 = vrot.lane.b32.xlu0 %v1004, 96
        %v1449 = vpop.permute.xlu0 %1448
        %1450 = vrot.lane.b32.xlu0 %v1009, 96
        %v1451 = vpop.permute.xlu0 %1450
        %1452 = vrot.lane.b32.xlu0 %v1014, 96
        %v1453 = vpop.permute.xlu0 %1452
        %1454 = vrot.lane.b32.xlu0 %v1019, 96
        %v1455 = vpop.permute.xlu0 %1454
        %1456 = vrot.lane.b32.xlu0 %v1024, 96
        %v1457 = vpop.permute.xlu0 %1456
        %v1458 = vsel %vm1197, %v1423, 0
        %v1460 = vsel %vm1197, %v1425, 0
        %v1462 = vsel %vm1197, %v1427, 0
        %v1464 = vsel %vm1197, %v1429, 0
        %v1466 = vsel %vm1197, %v1431, 0
        %v1468 = vsel %vm1197, %v1433, 0
        %v1470 = vsel %vm1197, %v1435, 0
        %v1472 = vsel %vm1197, %v1437, 0
        %v1474 = vsel %vm1197, %v1439, 0
        %v1476 = vsel %vm1197, %v1441, 0
        %v1478 = vsel %vm1197, %v1443, 0
        %v1480 = vsel %vm1197, %v1445, 0
        %v1482 = vsel %vm1197, %v1447, 0
        %v1484 = vsel %vm1197, %v1449, 0
        %v1486 = vsel %vm1197, %v1451, 0
        %v1488 = vsel %vm1197, %v1453, 0
        %v1490 = vsel %vm1197, %v1455, 0
        %v1492 = vsel %vm1197, %v1457, 0
        %1494 = vmatprep.subr.mxu0 0.0
        %1495 = vmatpush1.xpose.msra.mxu0 %v1492
        %1496 = vmatprep.subr.mxu0 0.0
        %1497 = vmatpush1.xpose.msra.mxu0 %v1490
        %1498 = vmatprep.subr.mxu0 0.0
        %1499 = vmatpush1.xpose.msra.mxu0 %v1488
        %1500 = vmatprep.subr.mxu0 0.0
        %1501 = vmatpush1.xpose.msra.mxu0 %v1486
        %1502 = vmatprep.subr.mxu0 0.0
        %1503 = vmatpush1.xpose.msra.mxu0 %v1484
        %1504 = vmatprep.subr.mxu0 0.0
        %1505 = vmatpush1.xpose.msra.mxu0 %v1482
        %1506 = vmatprep.subr.mxu0 0.0
        %1507 = vmatpush1.xpose.msra.mxu0 %v1480
        %1508 = vmatprep.subr.mxu0 0.0
        %1509 = vmatpush1.xpose.msra.mxu0 %v1478
        %1510 = vmatprep.subr.mxu0 0.0
        %1511 = vmatpush1.xpose.msra.mxu0 %v1476
        %1512 = vmatprep.subr.mxu0 0.0
        %1513 = vmatpush1.xpose.msra.mxu0 %v1474
        %1514 = vmatprep.subr.mxu0 0.0
        %1515 = vmatpush1.xpose.msra.mxu0 %v1472
        %1516 = vmatprep.subr.mxu0 0.0
        %1517 = vmatpush1.xpose.msra.mxu0 %v1470
        %1518 = vmatprep.subr.mxu0 0.0
        %1519 = vmatpush1.xpose.msra.mxu0 %v1468
        %1520 = vmatprep.subr.mxu0 0.0
        %1521 = vmatpush1.xpose.msra.mxu0 %v1466
        %1522 = vmatprep.subr.mxu0 0.0
        %1523 = vmatpush1.xpose.msra.mxu0 %v1464
        %1524 = vmatprep.subr.mxu0 0.0
        %1525 = vmatpush1.xpose.msra.mxu0 %v1462
        %1526 = vmatprep.subr.mxu0 0.0
        %1527 = vmatpush2.xpose.msra.mxu0 0.0
        %1528 = vmatprep.subr.mxu0 0.0
        %1529 = vmatpush2.xpose.msra.mxu0 0.0
        %1530 = vmatprep.subr.mxu0 0.0
        %1531 = vmatpush2.xpose.msra.mxu0 0.0
        %1532 = vmatprep.subr.mxu0 0.0
        %1533 = vmatpush2.xpose.msra.mxu0 0.0
        %1534 = vmatprep.subr.mxu0 0.0
        %1535 = vmatpush2.xpose.msra.mxu0 0.0
        %1536 = vmatprep.subr.mxu0 0.0
        %1537 = vmatpush2.xpose.msra.mxu0 0.0
        %1538 = vmatprep.subr.mxu0 0.0
        %1539 = vmatpush2.xpose.msra.mxu0 0.0
        %1540 = vmatprep.subr.mxu0 0.0
        %1541 = vmatpush2.xpose.msra.mxu0 0.0
        %1542 = vmatprep.subr.mxu0 0.0
        %1543 = vmatpush2.xpose.msra.mxu0 0.0
        %1544 = vmatprep.subr.mxu0 0.0
        %1545 = vmatpush2.xpose.msra.mxu0 0.0
        %1546 = vmatprep.subr.mxu0 0.0
        %1547 = vmatpush2.xpose.msra.mxu0 0.0
        %1548 = vmatprep.subr.mxu0 0.0
        %1549 = vmatpush2.xpose.msra.mxu0 0.0
        %1550 = vmatprep.subr.mxu0 0.0
        %1551 = vmatpush2.xpose.msra.mxu0 0.0
        %1552 = vmatprep.subr.mxu0 0.0
        %1553 = vmatpush2.xpose.msra.mxu0 0.0
        %1554 = vmatprep.subr.mxu0 0.0
        %1555 = vmatpush2.xpose.msra.mxu0 0.0
        %1556 = vmatprep.subr.mxu0 0.0
        %1557 = vmatpush2.xpose.msra.mxu0 0.0
        %1558 = vmatprep.mubr.f32.mxu0 0.0
        %1559 = vmatmul.mubr.f32.gmra.mxu0 %v1458
        %v1560 = vpop.f32.mrf.mxu0
        %v1561 = vadd.f32 0.0, %v1560
        %v1562 = vpop.f32.mrf.mxu0
        %1563 = vmatprep.mubr.f32.mxu0 0.0
        %1564 = vmatmul.mubr.f32.gmra.mxu0 %v1460
        %v1565 = vpop.f32.mrf.mxu0
        %v1566 = vadd.f32 0.0, %v1565
        %v1567 = vpop.f32.mrf.mxu0
        %1568 = vdwg.mxu0
        %1569 = vmax.xlane.f32.xlu0 %v1561
        %v1570 = vpop.xlane.xlu0 %1569
        %1571 = vmax.xlane.f32.xlu0 %v1566
        %v1572 = vpop.xlane.xlu0 %1571
        %v1573 = vsub.f32 %v1561, %v1570
        %v1574 = vsub.f32 %v1566, %v1572
        %v1575 = vmul.f32 %v1573, 1.442695
        %v1576 = vpow.pop %v1575
        %v1577 = vmul.f32 %v1574, 1.442695
        %v1578 = vpow.pop %v1577
        %1579 = vadd.xlane.f32.xlu0 %v1576
        %v1580 = vpop.xlane.xlu0 %1579
        %1581 = vadd.xlane.f32.xlu0 %v1578
        %v1582 = vpop.xlane.xlu0 %1581
        %v1583 = vrcp.pop %v1580
        %v1584 = vmul.f32 %v1576, %v1583
        %v1585 = vrcp.pop %v1582
        %v1586 = vmul.f32 %v1578, %v1585
        %v1587 = vadd.f32 %v1345, %v1584
        %v1588 = vadd.f32 %v1346, %v1586
        %1605 = vrot.lane.b32.xlu0 %v1117, 96
        %v1606 = vpop.permute.xlu0 %1605
        %1607 = vrot.lane.b32.xlu0 %v1122, 96
        %v1608 = vpop.permute.xlu0 %1607
        %1609 = vrot.lane.b32.xlu0 %v1127, 96
        %v1610 = vpop.permute.xlu0 %1609
        %1611 = vrot.lane.b32.xlu0 %v1132, 96
        %v1612 = vpop.permute.xlu0 %1611
        %1613 = vrot.lane.b32.xlu0 %v1137, 96
        %v1614 = vpop.permute.xlu0 %1613
        %1615 = vrot.lane.b32.xlu0 %v1142, 96
        %v1616 = vpop.permute.xlu0 %1615
        %1617 = vrot.lane.b32.xlu0 %v1147, 96
        %v1618 = vpop.permute.xlu0 %1617
        %1619 = vrot.lane.b32.xlu0 %v1152, 96
        %v1620 = vpop.permute.xlu0 %1619
        %1621 = vrot.lane.b32.xlu0 %v1157, 96
        %v1622 = vpop.permute.xlu0 %1621
        %1623 = vrot.lane.b32.xlu0 %v1162, 96
        %v1624 = vpop.permute.xlu0 %1623
        %1625 = vrot.lane.b32.xlu0 %v1167, 96
        %v1626 = vpop.permute.xlu0 %1625
        %1627 = vrot.lane.b32.xlu0 %v1172, 96
        %v1628 = vpop.permute.xlu0 %1627
        %1629 = vrot.lane.b32.xlu0 %v1177, 96
        %v1630 = vpop.permute.xlu0 %1629
        %1631 = vrot.lane.b32.xlu0 %v1182, 96
        %v1632 = vpop.permute.xlu0 %1631
        %1633 = vrot.lane.b32.xlu0 %v1187, 96
        %v1634 = vpop.permute.xlu0 %1633
        %1635 = vrot.lane.b32.xlu0 %v1192, 96
        %v1636 = vpop.permute.xlu0 %1635
        %1653 = vmatprep.subr.mxu0 0.0
        %1654 = vmatpush1.msra.mxu0 %v1636
        %1655 = vmatprep.subr.mxu0 0.0
        %1656 = vmatpush1.msra.mxu0 %v1634
        %1657 = vmatprep.subr.mxu0 0.0
        %1658 = vmatpush1.msra.mxu0 %v1632
        %1659 = vmatprep.subr.mxu0 0.0
        %1660 = vmatpush1.msra.mxu0 %v1630
        %1661 = vmatprep.subr.mxu0 0.0
        %1662 = vmatpush1.msra.mxu0 %v1628
        %1663 = vmatprep.subr.mxu0 0.0
        %1664 = vmatpush1.msra.mxu0 %v1626
        %1665 = vmatprep.subr.mxu0 0.0
        %1666 = vmatpush1.msra.mxu0 %v1624
        %1667 = vmatprep.subr.mxu0 0.0
        %1668 = vmatpush1.msra.mxu0 %v1622
        %1669 = vmatprep.subr.mxu0 0.0
        %1670 = vmatpush1.msra.mxu0 %v1620
        %1671 = vmatprep.subr.mxu0 0.0
        %1672 = vmatpush1.msra.mxu0 %v1618
        %1673 = vmatprep.subr.mxu0 0.0
        %1674 = vmatpush1.msra.mxu0 %v1616
        %1675 = vmatprep.subr.mxu0 0.0
        %1676 = vmatpush1.msra.mxu0 %v1614
        %1677 = vmatprep.subr.mxu0 0.0
        %1678 = vmatpush1.msra.mxu0 %v1612
        %1679 = vmatprep.subr.mxu0 0.0
        %1680 = vmatpush1.msra.mxu0 %v1610
        %1681 = vmatprep.subr.mxu0 0.0
        %1682 = vmatpush1.msra.mxu0 %v1608
        %1683 = vmatprep.subr.mxu0 0.0
        %1684 = vmatpush1.msra.mxu0 %v1606
        %1685 = vmatprep.subr.mxu0 0.0
        %1686 = vmatpush2.msra.mxu0 0.0
        %1687 = vmatprep.subr.mxu0 0.0
        %1688 = vmatpush2.msra.mxu0 0.0
        %1689 = vmatprep.subr.mxu0 0.0
        %1690 = vmatpush2.msra.mxu0 0.0
        %1691 = vmatprep.subr.mxu0 0.0
        %1692 = vmatpush2.msra.mxu0 0.0
        %1693 = vmatprep.subr.mxu0 0.0
        %1694 = vmatpush2.msra.mxu0 0.0
        %1695 = vmatprep.subr.mxu0 0.0
        %1696 = vmatpush2.msra.mxu0 0.0
        %1697 = vmatprep.subr.mxu0 0.0
        %1698 = vmatpush2.msra.mxu0 0.0
        %1699 = vmatprep.subr.mxu0 0.0
        %1700 = vmatpush2.msra.mxu0 0.0
        %1701 = vmatprep.subr.mxu0 0.0
        %1702 = vmatpush2.msra.mxu0 0.0
        %1703 = vmatprep.subr.mxu0 0.0
        %1704 = vmatpush2.msra.mxu0 0.0
        %1705 = vmatprep.subr.mxu0 0.0
        %1706 = vmatpush2.msra.mxu0 0.0
        %1707 = vmatprep.subr.mxu0 0.0
        %1708 = vmatpush2.msra.mxu0 0.0
        %1709 = vmatprep.subr.mxu0 0.0
        %1710 = vmatpush2.msra.mxu0 0.0
        %1711 = vmatprep.subr.mxu0 0.0
        %1712 = vmatpush2.msra.mxu0 0.0
        %1713 = vmatprep.subr.mxu0 0.0
        %1714 = vmatpush2.msra.mxu0 0.0
        %1715 = vmatprep.subr.mxu0 0.0
        %1716 = vmatpush2.msra.mxu0 0.0
        %1717 = vmatprep.mubr.f32.mxu0 0.0
        %1718 = vmatmul.mubr.f32.gmra.mxu0 %v1584
        %v1719 = vpop.f32.mrf.mxu0
        %v1720 = vadd.f32 0.0, %v1719
        %v1721 = vpop.f32.mrf.mxu0
        %1722 = vmatprep.mubr.f32.mxu0 0.0
        %1723 = vmatmul.mubr.f32.gmra.mxu0 %v1586
        %v1724 = vpop.f32.mrf.mxu0
        %v1725 = vadd.f32 0.0, %v1724
        %v1726 = vpop.f32.mrf.mxu0
        %1727 = vdwg.mxu0
        %1728 = vrot.lane.b32.xlu0 %v1195, 64
        %v1729 = vpop.permute.xlu0 %1728
        %1730 = vrot.lane.b32.xlu0 %v1196, 64
        %v1731 = vpop.permute.xlu0 %1730
        %1732 = vrot.lane.b32.xlu0 %v949, 64
        %v1733 = vpop.permute.xlu0 %1732
        %1734 = vrot.lane.b32.xlu0 %v954, 64
        %v1735 = vpop.permute.xlu0 %1734
        %1736 = vrot.lane.b32.xlu0 %v959, 64
        %v1737 = vpop.permute.xlu0 %1736
        %1738 = vrot.lane.b32.xlu0 %v964, 64
        %v1739 = vpop.permute.xlu0 %1738
        %1740 = vrot.lane.b32.xlu0 %v969, 64
        %v1741 = vpop.permute.xlu0 %1740
        %1742 = vrot.lane.b32.xlu0 %v974, 64
        %v1743 = vpop.permute.xlu0 %1742
        %1744 = vrot.lane.b32.xlu0 %v979, 64
        %v1745 = vpop.permute.xlu0 %1744
        %1746 = vrot.lane.b32.xlu0 %v984, 64
        %v1747 = vpop.permute.xlu0 %1746
        %1748 = vrot.lane.b32.xlu0 %v989, 64
        %v1749 = vpop.permute.xlu0 %1748
        %1750 = vrot.lane.b32.xlu0 %v994, 64
        %v1751 = vpop.permute.xlu0 %1750
        %1752 = vrot.lane.b32.xlu0 %v999, 64
        %v1753 = vpop.permute.xlu0 %1752
        %1754 = vrot.lane.b32.xlu0 %v1004, 64
        %v1755 = vpop.permute.xlu0 %1754
        %1756 = vrot.lane.b32.xlu0 %v1009, 64
        %v1757 = vpop.permute.xlu0 %1756
        %1758 = vrot.lane.b32.xlu0 %v1014, 64
        %v1759 = vpop.permute.xlu0 %1758
        %1760 = vrot.lane.b32.xlu0 %v1019, 64
        %v1761 = vpop.permute.xlu0 %1760
        %1762 = vrot.lane.b32.xlu0 %v1024, 64
        %v1763 = vpop.permute.xlu0 %1762
        %v1764 = vsel %vm1197, %v1729, 0
        %v1766 = vsel %vm1197, %v1731, 0
        %v1768 = vsel %vm1197, %v1733, 0
        %v1770 = vsel %vm1197, %v1735, 0
        %v1772 = vsel %vm1197, %v1737, 0
        %v1774 = vsel %vm1197, %v1739, 0
        %v1776 = vsel %vm1197, %v1741, 0
        %v1778 = vsel %vm1197, %v1743, 0
        %v1780 = vsel %vm1197, %v1745, 0
        %v1782 = vsel %vm1197, %v1747, 0
        %v1784 = vsel %vm1197, %v1749, 0
        %v1786 = vsel %vm1197, %v1751, 0
        %v1788 = vsel %vm1197, %v1753, 0
        %v1790 = vsel %vm1197, %v1755, 0
        %v1792 = vsel %vm1197, %v1757, 0
        %v1794 = vsel %vm1197, %v1759, 0
        %v1796 = vsel %vm1197, %v1761, 0
        %v1798 = vsel %vm1197, %v1763, 0
        %1800 = vmatprep.subr.mxu0 0.0
        %1801 = vmatpush1.xpose.msra.mxu0 %v1798
        %1802 = vmatprep.subr.mxu0 0.0
        %1803 = vmatpush1.xpose.msra.mxu0 %v1796
        %1804 = vmatprep.subr.mxu0 0.0
        %1805 = vmatpush1.xpose.msra.mxu0 %v1794
        %1806 = vmatprep.subr.mxu0 0.0
        %1807 = vmatpush1.xpose.msra.mxu0 %v1792
        %1808 = vmatprep.subr.mxu0 0.0
        %1809 = vmatpush1.xpose.msra.mxu0 %v1790
        %1810 = vmatprep.subr.mxu0 0.0
        %1811 = vmatpush1.xpose.msra.mxu0 %v1788
        %1812 = vmatprep.subr.mxu0 0.0
        %1813 = vmatpush1.xpose.msra.mxu0 %v1786
        %1814 = vmatprep.subr.mxu0 0.0
        %1815 = vmatpush1.xpose.msra.mxu0 %v1784
        %1816 = vmatprep.subr.mxu0 0.0
        %1817 = vmatpush1.xpose.msra.mxu0 %v1782
        %1818 = vmatprep.subr.mxu0 0.0
        %1819 = vmatpush1.xpose.msra.mxu0 %v1780
        %1820 = vmatprep.subr.mxu0 0.0
        %1821 = vmatpush1.xpose.msra.mxu0 %v1778
        %1822 = vmatprep.subr.mxu0 0.0
        %1823 = vmatpush1.xpose.msra.mxu0 %v1776
        %1824 = vmatprep.subr.mxu0 0.0
        %1825 = vmatpush1.xpose.msra.mxu0 %v1774
        %1826 = vmatprep.subr.mxu0 0.0
        %1827 = vmatpush1.xpose.msra.mxu0 %v1772
        %1828 = vmatprep.subr.mxu0 0.0
        %1829 = vmatpush1.xpose.msra.mxu0 %v1770
        %1830 = vmatprep.subr.mxu0 0.0
        %1831 = vmatpush1.xpose.msra.mxu0 %v1768
        %1832 = vmatprep.subr.mxu0 0.0
        %1833 = vmatpush2.xpose.msra.mxu0 0.0
        %1834 = vmatprep.subr.mxu0 0.0
        %1835 = vmatpush2.xpose.msra.mxu0 0.0
        %1836 = vmatprep.subr.mxu0 0.0
        %1837 = vmatpush2.xpose.msra.mxu0 0.0
        %1838 = vmatprep.subr.mxu0 0.0
        %1839 = vmatpush2.xpose.msra.mxu0 0.0
        %1840 = vmatprep.subr.mxu0 0.0
        %1841 = vmatpush2.xpose.msra.mxu0 0.0
        %1842 = vmatprep.subr.mxu0 0.0
        %1843 = vmatpush2.xpose.msra.mxu0 0.0
        %1844 = vmatprep.subr.mxu0 0.0
        %1845 = vmatpush2.xpose.msra.mxu0 0.0
        %1846 = vmatprep.subr.mxu0 0.0
        %1847 = vmatpush2.xpose.msra.mxu0 0.0
        %1848 = vmatprep.subr.mxu0 0.0
        %1849 = vmatpush2.xpose.msra.mxu0 0.0
        %1850 = vmatprep.subr.mxu0 0.0
        %1851 = vmatpush2.xpose.msra.mxu0 0.0
        %1852 = vmatprep.subr.mxu0 0.0
        %1853 = vmatpush2.xpose.msra.mxu0 0.0
        %1854 = vmatprep.subr.mxu0 0.0
        %1855 = vmatpush2.xpose.msra.mxu0 0.0
        %1856 = vmatprep.subr.mxu0 0.0
        %1857 = vmatpush2.xpose.msra.mxu0 0.0
        %1858 = vmatprep.subr.mxu0 0.0
        %1859 = vmatpush2.xpose.msra.mxu0 0.0
        %1860 = vmatprep.subr.mxu0 0.0
        %1861 = vmatpush2.xpose.msra.mxu0 0.0
        %1862 = vmatprep.subr.mxu0 0.0
        %1863 = vmatpush2.xpose.msra.mxu0 0.0
        %1864 = vmatprep.mubr.f32.mxu0 0.0
        %1865 = vmatmul.mubr.f32.gmra.mxu0 %v1764
        %v1866 = vpop.f32.mrf.mxu0
        %v1867 = vadd.f32 0.0, %v1866
        %v1868 = vpop.f32.mrf.mxu0
        %1869 = vmatprep.mubr.f32.mxu0 0.0
        %1870 = vmatmul.mubr.f32.gmra.mxu0 %v1766
        %v1871 = vpop.f32.mrf.mxu0
        %v1872 = vadd.f32 0.0, %v1871
        %v1873 = vpop.f32.mrf.mxu0
        %1874 = vdwg.mxu0
        %1875 = vmax.xlane.f32.xlu0 %v1867
        %v1876 = vpop.xlane.xlu0 %1875
        %1877 = vmax.xlane.f32.xlu0 %v1872
        %v1878 = vpop.xlane.xlu0 %1877
        %v1879 = vsub.f32 %v1867, %v1876
        %v1880 = vsub.f32 %v1872, %v1878
        %v1881 = vmul.f32 %v1879, 1.442695
        %v1882 = vpow.pop %v1881
        %v1883 = vmul.f32 %v1880, 1.442695
        %v1884 = vpow.pop %v1883
        %1885 = vadd.xlane.f32.xlu0 %v1882
        %v1886 = vpop.xlane.xlu0 %1885
        %1887 = vadd.xlane.f32.xlu0 %v1884
        %v1888 = vpop.xlane.xlu0 %1887
        %v1889 = vrcp.pop %v1886
        %v1890 = vmul.f32 %v1882, %v1889
        %v1891 = vrcp.pop %v1888
        %v1892 = vmul.f32 %v1884, %v1891
        %v1893 = vadd.f32 %v1587, %v1890
        %v1894 = vadd.f32 %v1588, %v1892
        %1895 = vrot.lane.b32.xlu0 %v1117, 64
        %v1896 = vpop.permute.xlu0 %1895
        %1897 = vrot.lane.b32.xlu0 %v1122, 64
        %v1898 = vpop.permute.xlu0 %1897
        %1899 = vrot.lane.b32.xlu0 %v1127, 64
        %v1900 = vpop.permute.xlu0 %1899
        %1901 = vrot.lane.b32.xlu0 %v1132, 64
        %v1902 = vpop.permute.xlu0 %1901
        %1903 = vrot.lane.b32.xlu0 %v1137, 64
        %v1904 = vpop.permute.xlu0 %1903
        %1905 = vrot.lane.b32.xlu0 %v1142, 64
        %v1906 = vpop.permute.xlu0 %1905
        %1907 = vrot.lane.b32.xlu0 %v1147, 64
        %v1908 = vpop.permute.xlu0 %1907
        %1909 = vrot.lane.b32.xlu0 %v1152, 64
        %v1910 = vpop.permute.xlu0 %1909
        %1911 = vrot.lane.b32.xlu0 %v1157, 64
        %v1912 = vpop.permute.xlu0 %1911
        %1913 = vrot.lane.b32.xlu0 %v1162, 64
        %v1914 = vpop.permute.xlu0 %1913
        %1915 = vrot.lane.b32.xlu0 %v1167, 64
        %v1916 = vpop.permute.xlu0 %1915
        %1917 = vrot.lane.b32.xlu0 %v1172, 64
        %v1918 = vpop.permute.xlu0 %1917
        %1919 = vrot.lane.b32.xlu0 %v1177, 64
        %v1920 = vpop.permute.xlu0 %1919
        %1921 = vrot.lane.b32.xlu0 %v1182, 64
        %v1922 = vpop.permute.xlu0 %1921
        %1923 = vrot.lane.b32.xlu0 %v1187, 64
        %v1924 = vpop.permute.xlu0 %1923
        %1925 = vrot.lane.b32.xlu0 %v1192, 64
        %v1926 = vpop.permute.xlu0 %1925
        %1943 = vmatprep.subr.mxu0 0.0
        %1944 = vmatpush1.msra.mxu0 %v1926
        %1945 = vmatprep.subr.mxu0 0.0
        %1946 = vmatpush1.msra.mxu0 %v1924
        %1947 = vmatprep.subr.mxu0 0.0
        %1948 = vmatpush1.msra.mxu0 %v1922
        %1949 = vmatprep.subr.mxu0 0.0
        %1950 = vmatpush1.msra.mxu0 %v1920
        %1951 = vmatprep.subr.mxu0 0.0
        %1952 = vmatpush1.msra.mxu0 %v1918
        %1953 = vmatprep.subr.mxu0 0.0
        %1954 = vmatpush1.msra.mxu0 %v1916
        %1955 = vmatprep.subr.mxu0 0.0
        %1956 = vmatpush1.msra.mxu0 %v1914
        %1957 = vmatprep.subr.mxu0 0.0
        %1958 = vmatpush1.msra.mxu0 %v1912
        %1959 = vmatprep.subr.mxu0 0.0
        %1960 = vmatpush1.msra.mxu0 %v1910
        %1961 = vmatprep.subr.mxu0 0.0
        %1962 = vmatpush1.msra.mxu0 %v1908
        %1963 = vmatprep.subr.mxu0 0.0
        %1964 = vmatpush1.msra.mxu0 %v1906
        %1965 = vmatprep.subr.mxu0 0.0
        %1966 = vmatpush1.msra.mxu0 %v1904
        %1967 = vmatprep.subr.mxu0 0.0
        %1968 = vmatpush1.msra.mxu0 %v1902
        %1969 = vmatprep.subr.mxu0 0.0
        %1970 = vmatpush1.msra.mxu0 %v1900
        %1971 = vmatprep.subr.mxu0 0.0
        %1972 = vmatpush1.msra.mxu0 %v1898
        %1973 = vmatprep.subr.mxu0 0.0
        %1974 = vmatpush1.msra.mxu0 %v1896
        %1975 = vmatprep.subr.mxu0 0.0
        %1976 = vmatpush2.msra.mxu0 0.0
        %1977 = vmatprep.subr.mxu0 0.0
        %1978 = vmatpush2.msra.mxu0 0.0
        %1979 = vmatprep.subr.mxu0 0.0
        %1980 = vmatpush2.msra.mxu0 0.0
        %1981 = vmatprep.subr.mxu0 0.0
        %1982 = vmatpush2.msra.mxu0 0.0
        %1983 = vmatprep.subr.mxu0 0.0
        %1984 = vmatpush2.msra.mxu0 0.0
        %1985 = vmatprep.subr.mxu0 0.0
        %1986 = vmatpush2.msra.mxu0 0.0
        %1987 = vmatprep.subr.mxu0 0.0
        %1988 = vmatpush2.msra.mxu0 0.0
        %1989 = vmatprep.subr.mxu0 0.0
        %1990 = vmatpush2.msra.mxu0 0.0
        %1991 = vmatprep.subr.mxu0 0.0
        %1992 = vmatpush2.msra.mxu0 0.0
        %1993 = vmatprep.subr.mxu0 0.0
        %1994 = vmatpush2.msra.mxu0 0.0
        %1995 = vmatprep.subr.mxu0 0.0
        %1996 = vmatpush2.msra.mxu0 0.0
        %1997 = vmatprep.subr.mxu0 0.0
        %1998 = vmatpush2.msra.mxu0 0.0
        %1999 = vmatprep.subr.mxu0 0.0
        %2000 = vmatpush2.msra.mxu0 0.0
        %2001 = vmatprep.subr.mxu0 0.0
        %2002 = vmatpush2.msra.mxu0 0.0
        %2003 = vmatprep.subr.mxu0 0.0
        %2004 = vmatpush2.msra.mxu0 0.0
        %2005 = vmatprep.subr.mxu0 0.0
        %2006 = vmatpush2.msra.mxu0 0.0
        %2007 = vmatprep.mubr.f32.mxu0 0.0
        %2008 = vmatmul.mubr.f32.gmra.mxu0 %v1890
        %v2009 = vpop.f32.mrf.mxu0
        %v2010 = vadd.f32 0.0, %v2009
        %v2011 = vpop.f32.mrf.mxu0
        %2012 = vmatprep.mubr.f32.mxu0 0.0
        %2013 = vmatmul.mubr.f32.gmra.mxu0 %v1892
        %v2014 = vpop.f32.mrf.mxu0
        %v2015 = vadd.f32 0.0, %v2014
        %v2016 = vpop.f32.mrf.mxu0
        %2017 = vdwg.mxu0
        %2018 = vrot.lane.b32.xlu0 %v1195, 32
        %v2019 = vpop.permute.xlu0 %2018
        %2020 = vrot.lane.b32.xlu0 %v1196, 32
        %v2021 = vpop.permute.xlu0 %2020
        %2022 = vrot.lane.b32.xlu0 %v949, 32
        %v2023 = vpop.permute.xlu0 %2022
        %2024 = vrot.lane.b32.xlu0 %v954, 32
        %v2025 = vpop.permute.xlu0 %2024
        %2026 = vrot.lane.b32.xlu0 %v959, 32
        %v2027 = vpop.permute.xlu0 %2026
        %2028 = vrot.lane.b32.xlu0 %v964, 32
        %v2029 = vpop.permute.xlu0 %2028
        %2030 = vrot.lane.b32.xlu0 %v969, 32
        %v2031 = vpop.permute.xlu0 %2030
        %2032 = vrot.lane.b32.xlu0 %v974, 32
        %v2033 = vpop.permute.xlu0 %2032
        %2034 = vrot.lane.b32.xlu0 %v979, 32
        %v2035 = vpop.permute.xlu0 %2034
        %2036 = vrot.lane.b32.xlu0 %v984, 32
        %v2037 = vpop.permute.xlu0 %2036
        %2038 = vrot.lane.b32.xlu0 %v989, 32
        %v2039 = vpop.permute.xlu0 %2038
        %2040 = vrot.lane.b32.xlu0 %v994, 32
        %v2041 = vpop.permute.xlu0 %2040
        %2042 = vrot.lane.b32.xlu0 %v999, 32
        %v2043 = vpop.permute.xlu0 %2042
        %2044 = vrot.lane.b32.xlu0 %v1004, 32
        %v2045 = vpop.permute.xlu0 %2044
        %2046 = vrot.lane.b32.xlu0 %v1009, 32
        %v2047 = vpop.permute.xlu0 %2046
        %2048 = vrot.lane.b32.xlu0 %v1014, 32
        %v2049 = vpop.permute.xlu0 %2048
        %2050 = vrot.lane.b32.xlu0 %v1019, 32
        %v2051 = vpop.permute.xlu0 %2050
        %2052 = vrot.lane.b32.xlu0 %v1024, 32
        %v2053 = vpop.permute.xlu0 %2052
        %v2054 = vsel %vm1197, %v2019, 0
        %v2056 = vsel %vm1197, %v2021, 0
        %v2058 = vsel %vm1197, %v2023, 0
        %v2060 = vsel %vm1197, %v2025, 0
        %v2062 = vsel %vm1197, %v2027, 0
        %v2064 = vsel %vm1197, %v2029, 0
        %v2066 = vsel %vm1197, %v2031, 0
        %v2068 = vsel %vm1197, %v2033, 0
        %v2070 = vsel %vm1197, %v2035, 0
        %v2072 = vsel %vm1197, %v2037, 0
        %v2074 = vsel %vm1197, %v2039, 0
        %v2076 = vsel %vm1197, %v2041, 0
        %v2078 = vsel %vm1197, %v2043, 0
        %v2080 = vsel %vm1197, %v2045, 0
        %v2082 = vsel %vm1197, %v2047, 0
        %v2084 = vsel %vm1197, %v2049, 0
        %v2086 = vsel %vm1197, %v2051, 0
        %v2088 = vsel %vm1197, %v2053, 0
        %2090 = vmatprep.subr.mxu0 0.0
        %2091 = vmatpush1.xpose.msra.mxu0 %v2088
        %2092 = vmatprep.subr.mxu0 0.0
        %2093 = vmatpush1.xpose.msra.mxu0 %v2086
        %2094 = vmatprep.subr.mxu0 0.0
        %2095 = vmatpush1.xpose.msra.mxu0 %v2084
        %2096 = vmatprep.subr.mxu0 0.0
        %2097 = vmatpush1.xpose.msra.mxu0 %v2082
        %2098 = vmatprep.subr.mxu0 0.0
        %2099 = vmatpush1.xpose.msra.mxu0 %v2080
        %2100 = vmatprep.subr.mxu0 0.0
        %2101 = vmatpush1.xpose.msra.mxu0 %v2078
        %2102 = vmatprep.subr.mxu0 0.0
        %2103 = vmatpush1.xpose.msra.mxu0 %v2076
        %2104 = vmatprep.subr.mxu0 0.0
        %2105 = vmatpush1.xpose.msra.mxu0 %v2074
        %2106 = vmatprep.subr.mxu0 0.0
        %2107 = vmatpush1.xpose.msra.mxu0 %v2072
        %2108 = vmatprep.subr.mxu0 0.0
        %2109 = vmatpush1.xpose.msra.mxu0 %v2070
        %2110 = vmatprep.subr.mxu0 0.0
        %2111 = vmatpush1.xpose.msra.mxu0 %v2068
        %2112 = vmatprep.subr.mxu0 0.0
        %2113 = vmatpush1.xpose.msra.mxu0 %v2066
        %2114 = vmatprep.subr.mxu0 0.0
        %2115 = vmatpush1.xpose.msra.mxu0 %v2064
        %2116 = vmatprep.subr.mxu0 0.0
        %2117 = vmatpush1.xpose.msra.mxu0 %v2062
        %2118 = vmatprep.subr.mxu0 0.0
        %2119 = vmatpush1.xpose.msra.mxu0 %v2060
        %2120 = vmatprep.subr.mxu0 0.0
        %2121 = vmatpush1.xpose.msra.mxu0 %v2058
        %2122 = vmatprep.subr.mxu0 0.0
        %2123 = vmatpush2.xpose.msra.mxu0 0.0
        %2124 = vmatprep.subr.mxu0 0.0
        %2125 = vmatpush2.xpose.msra.mxu0 0.0
        %2126 = vmatprep.subr.mxu0 0.0
        %2127 = vmatpush2.xpose.msra.mxu0 0.0
        %2128 = vmatprep.subr.mxu0 0.0
        %2129 = vmatpush2.xpose.msra.mxu0 0.0
        %2130 = vmatprep.subr.mxu0 0.0
        %2131 = vmatpush2.xpose.msra.mxu0 0.0
        %2132 = vmatprep.subr.mxu0 0.0
        %2133 = vmatpush2.xpose.msra.mxu0 0.0
        %2134 = vmatprep.subr.mxu0 0.0
        %2135 = vmatpush2.xpose.msra.mxu0 0.0
        %2136 = vmatprep.subr.mxu0 0.0
        %2137 = vmatpush2.xpose.msra.mxu0 0.0
        %2138 = vmatprep.subr.mxu0 0.0
        %2139 = vmatpush2.xpose.msra.mxu0 0.0
        %2140 = vmatprep.subr.mxu0 0.0
        %2141 = vmatpush2.xpose.msra.mxu0 0.0
        %2142 = vmatprep.subr.mxu0 0.0
        %2143 = vmatpush2.xpose.msra.mxu0 0.0
        %2144 = vmatprep.subr.mxu0 0.0
        %2145 = vmatpush2.xpose.msra.mxu0 0.0
        %2146 = vmatprep.subr.mxu0 0.0
        %2147 = vmatpush2.xpose.msra.mxu0 0.0
        %2148 = vmatprep.subr.mxu0 0.0
        %2149 = vmatpush2.xpose.msra.mxu0 0.0
        %2150 = vmatprep.subr.mxu0 0.0
        %2151 = vmatpush2.xpose.msra.mxu0 0.0
        %2152 = vmatprep.subr.mxu0 0.0
        %2153 = vmatpush2.xpose.msra.mxu0 0.0
        %2154 = vmatprep.mubr.f32.mxu0 0.0
        %2155 = vmatmul.mubr.f32.gmra.mxu0 %v2054
        %v2156 = vpop.f32.mrf.mxu0
        %v2157 = vadd.f32 0.0, %v2156
        %v2158 = vpop.f32.mrf.mxu0
        %2159 = vmatprep.mubr.f32.mxu0 0.0
        %2160 = vmatmul.mubr.f32.gmra.mxu0 %v2056
        %v2161 = vpop.f32.mrf.mxu0
        %v2162 = vadd.f32 0.0, %v2161
        %v2163 = vpop.f32.mrf.mxu0
        %2164 = vdwg.mxu0
        %2165 = vmax.xlane.f32.xlu0 %v2157
        %v2166 = vpop.xlane.xlu0 %2165
        %2167 = vmax.xlane.f32.xlu0 %v2162
        %v2168 = vpop.xlane.xlu0 %2167
        %v2169 = vsub.f32 %v2157, %v2166
        %v2170 = vsub.f32 %v2162, %v2168
        %v2171 = vmul.f32 %v2169, 1.442695
        %v2172 = vpow.pop %v2171
        %v2173 = vmul.f32 %v2170, 1.442695
        %v2174 = vpow.pop %v2173
        %2175 = vadd.xlane.f32.xlu0 %v2172
        %v2176 = vpop.xlane.xlu0 %2175
        %2177 = vadd.xlane.f32.xlu0 %v2174
        %v2178 = vpop.xlane.xlu0 %2177
        %v2179 = vrcp.pop %v2176
        %v2180 = vmul.f32 %v2172, %v2179
        %v2181 = vrcp.pop %v2178
        %v2182 = vmul.f32 %v2174, %v2181
        %v2183 = vadd.f32 %v1893, %v2180
        %v2184 = vadd.f32 %v1894, %v2182
        %2185 = vrot.lane.b32.xlu0 %v1117, 32
        %v2186 = vpop.permute.xlu0 %2185
        %2187 = vrot.lane.b32.xlu0 %v1122, 32
        %v2188 = vpop.permute.xlu0 %2187
        %2189 = vrot.lane.b32.xlu0 %v1127, 32
        %v2190 = vpop.permute.xlu0 %2189
        %2191 = vrot.lane.b32.xlu0 %v1132, 32
        %v2192 = vpop.permute.xlu0 %2191
        %2193 = vrot.lane.b32.xlu0 %v1137, 32
        %v2194 = vpop.permute.xlu0 %2193
        %2195 = vrot.lane.b32.xlu0 %v1142, 32
        %v2196 = vpop.permute.xlu0 %2195
        %2197 = vrot.lane.b32.xlu0 %v1147, 32
        %v2198 = vpop.permute.xlu0 %2197
        %2199 = vrot.lane.b32.xlu0 %v1152, 32
        %v2200 = vpop.permute.xlu0 %2199
        %2201 = vrot.lane.b32.xlu0 %v1157, 32
        %v2202 = vpop.permute.xlu0 %2201
        %2203 = vrot.lane.b32.xlu0 %v1162, 32
        %v2204 = vpop.permute.xlu0 %2203
        %2205 = vrot.lane.b32.xlu0 %v1167, 32
        %v2206 = vpop.permute.xlu0 %2205
        %2207 = vrot.lane.b32.xlu0 %v1172, 32
        %v2208 = vpop.permute.xlu0 %2207
        %2209 = vrot.lane.b32.xlu0 %v1177, 32
        %v2210 = vpop.permute.xlu0 %2209
        %2211 = vrot.lane.b32.xlu0 %v1182, 32
        %v2212 = vpop.permute.xlu0 %2211
        %2213 = vrot.lane.b32.xlu0 %v1187, 32
        %v2214 = vpop.permute.xlu0 %2213
        %2215 = vrot.lane.b32.xlu0 %v1192, 32
        %v2216 = vpop.permute.xlu0 %2215
        %2233 = vmatprep.subr.mxu0 0.0
        %2234 = vmatpush1.msra.mxu0 %v2216
        %2235 = vmatprep.subr.mxu0 0.0
        %2236 = vmatpush1.msra.mxu0 %v2214
        %2237 = vmatprep.subr.mxu0 0.0
        %2238 = vmatpush1.msra.mxu0 %v2212
        %2239 = vmatprep.subr.mxu0 0.0
        %2240 = vmatpush1.msra.mxu0 %v2210
        %2241 = vmatprep.subr.mxu0 0.0
        %2242 = vmatpush1.msra.mxu0 %v2208
        %2243 = vmatprep.subr.mxu0 0.0
        %2244 = vmatpush1.msra.mxu0 %v2206
        %2245 = vmatprep.subr.mxu0 0.0
        %2246 = vmatpush1.msra.mxu0 %v2204
        %2247 = vmatprep.subr.mxu0 0.0
        %2248 = vmatpush1.msra.mxu0 %v2202
        %2249 = vmatprep.subr.mxu0 0.0
        %2250 = vmatpush1.msra.mxu0 %v2200
        %2251 = vmatprep.subr.mxu0 0.0
        %2252 = vmatpush1.msra.mxu0 %v2198
        %2253 = vmatprep.subr.mxu0 0.0
        %2254 = vmatpush1.msra.mxu0 %v2196
        %2255 = vmatprep.subr.mxu0 0.0
        %2256 = vmatpush1.msra.mxu0 %v2194
        %2257 = vmatprep.subr.mxu0 0.0
        %2258 = vmatpush1.msra.mxu0 %v2192
        %2259 = vmatprep.subr.mxu0 0.0
        %2260 = vmatpush1.msra.mxu0 %v2190
        %2261 = vmatprep.subr.mxu0 0.0
        %2262 = vmatpush1.msra.mxu0 %v2188
        %2263 = vmatprep.subr.mxu0 0.0
        %2264 = vmatpush1.msra.mxu0 %v2186
        %2265 = vmatprep.subr.mxu0 0.0
        %2266 = vmatpush2.msra.mxu0 0.0
        %2267 = vmatprep.subr.mxu0 0.0
        %2268 = vmatpush2.msra.mxu0 0.0
        %2269 = vmatprep.subr.mxu0 0.0
        %2270 = vmatpush2.msra.mxu0 0.0
        %2271 = vmatprep.subr.mxu0 0.0
        %2272 = vmatpush2.msra.mxu0 0.0
        %2273 = vmatprep.subr.mxu0 0.0
        %2274 = vmatpush2.msra.mxu0 0.0
        %2275 = vmatprep.subr.mxu0 0.0
        %2276 = vmatpush2.msra.mxu0 0.0
        %2277 = vmatprep.subr.mxu0 0.0
        %2278 = vmatpush2.msra.mxu0 0.0
        %2279 = vmatprep.subr.mxu0 0.0
        %2280 = vmatpush2.msra.mxu0 0.0
        %2281 = vmatprep.subr.mxu0 0.0
        %2282 = vmatpush2.msra.mxu0 0.0
        %2283 = vmatprep.subr.mxu0 0.0
        %2284 = vmatpush2.msra.mxu0 0.0
        %2285 = vmatprep.subr.mxu0 0.0
        %2286 = vmatpush2.msra.mxu0 0.0
        %2287 = vmatprep.subr.mxu0 0.0
        %2288 = vmatpush2.msra.mxu0 0.0
        %2289 = vmatprep.subr.mxu0 0.0
        %2290 = vmatpush2.msra.mxu0 0.0
        %2291 = vmatprep.subr.mxu0 0.0
        %2292 = vmatpush2.msra.mxu0 0.0
        %2293 = vmatprep.subr.mxu0 0.0
        %2294 = vmatpush2.msra.mxu0 0.0
        %2295 = vmatprep.subr.mxu0 0.0
        %2296 = vmatpush2.msra.mxu0 0.0
        %2297 = vmatprep.mubr.f32.mxu0 0.0
        %2298 = vmatmul.mubr.f32.gmra.mxu0 %v2180
        %v2299 = vpop.f32.mrf.mxu0
        %v2300 = vadd.f32 0.0, %v2299
        %v2301 = vpop.f32.mrf.mxu0
        %2302 = vmatprep.mubr.f32.mxu0 0.0
        %2303 = vmatmul.mubr.f32.gmra.mxu0 %v2182
        %v2304 = vpop.f32.mrf.mxu0
        %v2305 = vadd.f32 0.0, %v2304
        %v2306 = vpop.f32.mrf.mxu0
        %2307 = vdwg.mxu0
        %2310 = vrot.lane.b32.xlu0 %v1720, 32
        %v2311 = vpop.permute.xlu0 %2310
        %2312 = vrot.lane.b32.xlu0 %v1725, 32
        %v2313 = vpop.permute.xlu0 %2312
        %2318 = vrot.lane.b32.xlu0 %v2010, 64
        %v2319 = vpop.permute.xlu0 %2318
        %2320 = vrot.lane.b32.xlu0 %v2015, 64
        %v2321 = vpop.permute.xlu0 %2320
        %2326 = vrot.lane.b32.xlu0 %v2300, 96
        %v2327 = vpop.permute.xlu0 %2326
        %2328 = vrot.lane.b32.xlu0 %v2305, 96
        %v2329 = vpop.permute.xlu0 %2328
        %v2332 = vsel %vm1197, %v1414, %v2311
        %v2333 = vsel %vm1197, %v1419, %v2313
        %vm2334 = vcmask 523264
        %v2335 = vsel %vm2334, %v2332, %v2319
        %v2336 = vsel %vm2334, %v2333, %v2321
        %vm2337 = vcmask 785408
        %v2338 = vsel %vm2337, %v2335, %v2327
        %v2339 = vsel %vm2337, %v2336, %v2329
        %v2340 = vld [vmem:[#allocation14] sm:$0xff]
        %v2341 = vld [vmem:[#allocation14 + $0x8] sm:$0xff]
        %v2342 = vld [vmem:[#allocation14 + $0x10] sm:$0xff]
        %v2343 = vld [vmem:[#allocation14 + $0x18] sm:$0xff]
        %v2344 = vld [vmem:[#allocation14 + $0x20] sm:$0xff]
        %v2345 = vld [vmem:[#allocation14 + $0x28] sm:$0xff]
        %v2346 = vld [vmem:[#allocation14 + $0x30] sm:$0xff]
        %v2347 = vld [vmem:[#allocation14 + $0x38] sm:$0xff]
        %v2348 = vld [vmem:[#allocation14 + $0x40] sm:$0xff]
        %v2349 = vld [vmem:[#allocation14 + $0x48] sm:$0xff]
        %v2350 = vld [vmem:[#allocation14 + $0x50] sm:$0xff]
        %v2351 = vld [vmem:[#allocation14 + $0x58] sm:$0xff]
        %v2352 = vld [vmem:[#allocation14 + $0x60] sm:$0xff]
        %v2353 = vld [vmem:[#allocation14 + $0x68] sm:$0xff]
        %v2354 = vld [vmem:[#allocation14 + $0x70] sm:$0xff]
        %v2355 = vld [vmem:[#allocation14 + $0x78] sm:$0xff]
        %v2356 = vld [vmem:[%s11] sm:$0x1]
        %v2358 = vlaneseq
        %v2359 = vshrl.u32 %v2358, 7
        %v2360 = vsub.s32 0, %v2359
        %v2361 = vrot.slane %v2356, %v2360
        %2363 = vmatprep.subr.mxu0 0.0
        %2364 = vmatpush1.msra.mxu0 %v2355
        %2365 = vmatprep.subr.mxu0 0.0
        %2366 = vmatpush1.msra.mxu0 %v2354
        %2367 = vmatprep.subr.mxu0 0.0
        %2368 = vmatpush1.msra.mxu0 %v2353
        %2369 = vmatprep.subr.mxu0 0.0
        %2370 = vmatpush1.msra.mxu0 %v2352
        %2371 = vmatprep.subr.mxu0 0.0
        %2372 = vmatpush1.msra.mxu0 %v2351
        %2373 = vmatprep.subr.mxu0 0.0
        %2374 = vmatpush1.msra.mxu0 %v2350
        %2375 = vmatprep.subr.mxu0 0.0
        %2376 = vmatpush1.msra.mxu0 %v2349
        %2377 = vmatprep.subr.mxu0 0.0
        %2378 = vmatpush1.msra.mxu0 %v2348
        %2379 = vmatprep.subr.mxu0 0.0
        %2380 = vmatpush1.msra.mxu0 %v2347
        %2381 = vmatprep.subr.mxu0 0.0
        %2382 = vmatpush1.msra.mxu0 %v2346
        %2383 = vmatprep.subr.mxu0 0.0
        %2384 = vmatpush1.msra.mxu0 %v2345
        %2385 = vmatprep.subr.mxu0 0.0
        %2386 = vmatpush1.msra.mxu0 %v2344
        %2387 = vmatprep.subr.mxu0 0.0
        %2388 = vmatpush1.msra.mxu0 %v2343
        %2389 = vmatprep.subr.mxu0 0.0
        %2390 = vmatpush1.msra.mxu0 %v2342
        %2391 = vmatprep.subr.mxu0 0.0
        %2392 = vmatpush1.msra.mxu0 %v2341
        %2393 = vmatprep.subr.mxu0 0.0
        %2394 = vmatpush1.msra.mxu0 %v2340
        %2395 = vmatprep.subr.mxu0 0.0
        %2396 = vmatpush2.msra.mxu0 0.0
        %2397 = vmatprep.subr.mxu0 0.0
        %2398 = vmatpush2.msra.mxu0 0.0
        %2399 = vmatprep.subr.mxu0 0.0
        %2400 = vmatpush2.msra.mxu0 0.0
        %2401 = vmatprep.subr.mxu0 0.0
        %2402 = vmatpush2.msra.mxu0 0.0
        %2403 = vmatprep.subr.mxu0 0.0
        %2404 = vmatpush2.msra.mxu0 0.0
        %2405 = vmatprep.subr.mxu0 0.0
        %2406 = vmatpush2.msra.mxu0 0.0
        %2407 = vmatprep.subr.mxu0 0.0
        %2408 = vmatpush2.msra.mxu0 0.0
        %2409 = vmatprep.subr.mxu0 0.0
        %2410 = vmatpush2.msra.mxu0 0.0
        %2411 = vmatprep.subr.mxu0 0.0
        %2412 = vmatpush2.msra.mxu0 0.0
        %2413 = vmatprep.subr.mxu0 0.0
        %2414 = vmatpush2.msra.mxu0 0.0
        %2415 = vmatprep.subr.mxu0 0.0
        %2416 = vmatpush2.msra.mxu0 0.0
        %2417 = vmatprep.subr.mxu0 0.0
        %2418 = vmatpush2.msra.mxu0 0.0
        %2419 = vmatprep.subr.mxu0 0.0
        %2420 = vmatpush2.msra.mxu0 0.0
        %2421 = vmatprep.subr.mxu0 0.0
        %2422 = vmatpush2.msra.mxu0 0.0
        %2423 = vmatprep.subr.mxu0 0.0
        %2424 = vmatpush2.msra.mxu0 0.0
        %2425 = vmatprep.subr.mxu0 0.0
        %2426 = vmatpush2.msra.mxu0 0.0
        %2427 = vmatprep.mubr.f32.mxu0 0.0
        %2428 = vmatmul.mubr.f32.gmra.mxu0 %v2338
        %v2429 = vpop.f32.mrf.mxu0
        %v2430 = vadd.f32 %v2361, %v2429
        %v2431 = vpop.f32.mrf.mxu0
        %2432 = vmatprep.mubr.f32.mxu0 0.0
        %2433 = vmatmul.mubr.f32.gmra.mxu0 %v2339
        %v2434 = vpop.f32.mrf.mxu0
        %v2435 = vadd.f32 %v2361, %v2434
        %v2436 = vpop.f32.mrf.mxu0
        %2437 = vdwg.mxu0
        %v2438 = vld [vmem:[%s640] sm:$0xff]
        %v2439 = vld [vmem:[%s640 + $0x8] sm:$0xff]
        %v2440 = vadd.f32 %v2438, %v2430
        %v2441 = vadd.f32 %v2439, %v2435
        %2442 = vadd.xlane.f32.xlu0 %v2440
        %v2443 = vpop.xlane.xlu0 %2442
        %2444 = vadd.xlane.f32.xlu0 %v2441
        %v2445 = vpop.xlane.xlu0 %2444
        %v2446 = vrcp.pop 128.0
        %v2447 = vmul.f32 %v2443, %v2446
        %v2448 = vmul.f32 %v2445, %v2446
        %v2449 = vsub.f32 %v2440, %v2447
        %v2450 = vsub.f32 %v2441, %v2448
        %v2451 = vmul.f32 %v2449, %v2449
        %v2452 = vmul.f32 %v2450, %v2450
        %2453 = vadd.xlane.f32.xlu0 %v2451
        %v2454 = vpop.xlane.xlu0 %2453
        %2455 = vadd.xlane.f32.xlu0 %v2452
        %v2456 = vpop.xlane.xlu0 %2455
        %v2457 = vmul.f32 %v2454, %v2446
        %v2458 = vmul.f32 %v2456, %v2446
        %v2459 = vadd.f32 %v2457, 1e-05
        %v2460 = vadd.f32 %v2458, 1e-05
        %v2461 = vrsqrt.pop %v2459
        %v2462 = vrsqrt.pop %v2460
        %v2463 = vmul.f32 %v2449, %v2461
        %v2464 = vmul.f32 %v2450, %v2462
        %v2465 = vld [vmem:[%s12] sm:$0x1]
        %v2467 = vlaneseq
        %v2468 = vshrl.u32 %v2467, 7
        %v2469 = vsub.s32 0, %v2468
        %v2470 = vrot.slane %v2465, %v2469
        %v2472 = vmul.f32 %v2463, %v2470
        %v2473 = vmul.f32 %v2464, %v2470
        %v2474 = vld [vmem:[%s13] sm:$0x1]
        %v2476 = vlaneseq
        %v2477 = vshrl.u32 %v2476, 7
        %v2478 = vsub.s32 0, %v2477
        %v2479 = vrot.slane %v2474, %v2478
        %v2481 = vadd.f32 %v2472, %v2479
        %v2482 = vadd.f32 %v2473, %v2479
        %2483 = vst [vmem:[%s715] sm:$0xff] %v2481
        %2484 = vst [vmem:[%s715 + $0x8] sm:$0xff] %v2482
        %v2485 = vmul.f32 %v2183, 0.25
        %v2486 = vmul.f32 %v2184, 0.25
        %2487 = vst [vmem:[%s722] sm:$0xff] %v2485
        %2488 = vst [vmem:[%s722 + $0x8] sm:$0xff] %v2486
        %s2489 = sand.u32 %s384, 1
        %s2490 = scalar_lea.sflag [#allocation4], %s2489
        %s2491 = sand.u32 %s384, 1
        %s2492 = smul.addr %s2491, 16
        %s2493 = scalar_lea.vmem [#allocation16], %s2492
        %s2494 = sand.u32 %s412, 1
        %s2495 = scalar_lea.sflag [#allocation18], %s2494
        %s2496 = sand.u32 %s412, 1
        %s2497 = smul.addr %s2496, 16
        %s2498 = scalar_lea.vmem [#allocation17], %s2497
        // Predicated region
        $region109: #{tpu_custom_call.1} parent=75 // pred_check
          %p2499 = pneg %p394
        $region110: #{tpu_custom_call.1} parent=75 // pred_check_branch
          %2501 = sbr.rel (%p2499) target = $region112
        $region111: #{tpu_custom_call.1} parent=75 // pred_region
          %s2502 = smul.u32 2, %s49
          %s2504 = ssub.s32 256, 256
          %2505 = vsyncadd %s2490, %s2504
          %s2506 = smul.addr %s48, 2
          %s2507 = sadd.s32 %s2502, %s2506
          %s2508 = smul.addr %s2507, 128
          %s2509 = scalar_lea.hbm %s14, %s2508
          %s2510 = sshll.u32 %s2493, 4
          %s2511 = int_to_ptr.vmem [resolvable:$true] %s2510
          %2516 = dma.vmem_to_hbm [thread:$0]  %s2511, 256, %s2509, %s2490, 128, 128, 8
        $region112: #{tpu_custom_call.1} parent=75 // pred_fallthru
          _
        // Predicated region
        $region113: #{tpu_custom_call.1} parent=75 // pred_check
          %p2517 = pneg %p422
        $region114: #{tpu_custom_call.1} parent=75 // pred_check_branch
          %2519 = sbr.rel (%p2517) target = $region116
        $region115: #{tpu_custom_call.1} parent=75 // pred_region
          %s2520 = smul.u32 2, %s49
          %s2522 = ssub.s32 256, 256
          %2523 = vsyncadd %s2495, %s2522
          %s2524 = smul.addr %s48, 2
          %s2525 = sadd.s32 %s2520, %s2524
          %s2526 = smul.addr %s2525, 128
          %s2527 = scalar_lea.hbm %s15, %s2526
          %s2528 = sshll.u32 %s2498, 4
          %s2529 = int_to_ptr.vmem [resolvable:$true] %s2528
          %2534 = dma.vmem_to_hbm [thread:$0]  %s2529, 256, %s2527, %s2495, 128, 128, 8
        $region116: #{tpu_custom_call.1} parent=75 // pred_fallthru
          _
      $region76: #{tpu_custom_call.1} parent=5 // pred_fallthru
        _
      %p2535 = scmp.le.s32.totalorder 2, %s39
      // Predicated region
      $region117: #{tpu_custom_call.1} parent=5 // pred_check
        %p2536 = pneg %p2535
      $region118: #{tpu_custom_call.1} parent=5 // pred_check_branch
        %2538 = sbr.rel (%p2536) target = $region120
      $region119: #{tpu_custom_call.1} parent=5 // pred_region
        %s2539 = ssub.s32 %s39, 2
        // Predicated region
        $region121: #{tpu_custom_call.1} parent=119 // pred_check
          %p2540 = pneg %p400
        $region122: #{tpu_custom_call.1} parent=119 // pred_check_branch
          %2542 = sbr.rel (%p2540) target = $region124
        $region123: #{tpu_custom_call.1} parent=119 // pred_region
          %s2543 = sand.u32 %s385, 1
          %s2544 = scalar_lea.sflag [#allocation4], %s2543
          %s2545 = sand.u32 %s385, 1
          %s2546 = smul.addr %s2545, 16
          %s2547 = scalar_lea.vmem [#allocation16], %s2546
          %2548 = dma.done %s2544, 256
        $region124: #{tpu_custom_call.1} parent=119 // pred_fallthru
          _
        // Predicated region
        $region125: #{tpu_custom_call.1} parent=119 // pred_check
          %p2549 = pneg %p428
        $region126: #{tpu_custom_call.1} parent=119 // pred_check_branch
          %2551 = sbr.rel (%p2549) target = $region128
        $region127: #{tpu_custom_call.1} parent=119 // pred_region
          %s2552 = sand.u32 %s413, 1
          %s2553 = scalar_lea.sflag [#allocation18], %s2552
          %s2554 = sand.u32 %s413, 1
          %s2555 = smul.addr %s2554, 16
          %s2556 = scalar_lea.vmem [#allocation17], %s2555
          %2557 = dma.done %s2553, 256
        $region128: #{tpu_custom_call.1} parent=119 // pred_fallthru
          _
      $region120: #{tpu_custom_call.1} parent=5 // pred_fallthru
        _
    $region6: #{tpu_custom_call.1} parent=1 // loop_footer
      %s43 = sadd.s32 1, %s39
    $region7: #{tpu_custom_call.1} parent=1 // loop_footer_branch
      %38 = sbr.rel target = $region3
    $region8: #{tpu_custom_call.1} parent=1 // loop_exit
      _
    %2558 = vsyncpa [#allocation3], 1
    %s2559 = scalar_lea.sflag [#allocation3], 1
    %2560 = vsyncpa %s2559, 1
    %2561 = vsyncpa [#allocation6], 1
    %s2562 = scalar_lea.sflag [#allocation6], 1
    %2563 = vsyncpa %s2562, 1
    %2564 = vsyncpa [#allocation9], 1
    %s2565 = scalar_lea.sflag [#allocation9], 1
    %2566 = vsyncpa %s2565, 1
    %2567 = vsyncpa [#allocation12], 1
    %2568 = vsyncpa [#allocation15], 1
    %2569 = vsyncpa [#allocation4], 1
    %s2570 = scalar_lea.sflag [#allocation4], 1
    %2571 = vsyncpa %s2570, 1
    %2572 = vsyncpa [#allocation18], 1
    %s2573 = scalar_lea.sflag [#allocation18], 1
    %2574 = vsyncpa %s2573, 1

</llo_original>
